<compile_context>
chip_gen: v5e
topology: v5e:2x2
jax: 0.10.0
libtpu: 0.0.40
codegen_flags: <defaults>
</compile_context>

<pallas_src>
import functools

import jax
import jax.numpy as jnp
from jax.experimental import pallas as pl
from jax.experimental.pallas import tpu as pltpu


def _bert_ffn_kernel(x_ref, w1_ref, b1_ref, w2_ref, b2_ref, gamma_ref, beta_ref,
                     o_ref, *, eps, approximate_gelu):
    """One row tile per grid step; weights are grid-invariant (VMEM-resident).

    x_ref:     (TM, H)  fp32 att_out tile (also the residual)
    w1_ref:    (H, I)   bf16 intermediate dense weight (resident)
    b1_ref:    (1, I)   fp32
    w2_ref:    (I, H)   bf16 output dense weight (resident)
    b2_ref:    (1, H)   fp32
    gamma_ref: (1, H)   LayerNorm weight
    beta_ref:  (1, H)   LayerNorm bias
    o_ref:     (TM, H)
    """
    x = x_ref[...]                                  # fp32 residual
    x_bf = x.astype(jnp.bfloat16)                   # single cast per row tile

    # --- BertIntermediate: dense + GELU ---
    h = jnp.dot(x_bf, w1_ref[...], preferred_element_type=jnp.float32)
    h = h + b1_ref[...]
    if approximate_gelu:
        # tanh-form GELU: the transcendental goes to the EUP slot (VALU relief).
        h = 0.5 * h * (1.0 + jnp.tanh(0.7978845608028654
                                      * (h + 0.044715 * h * h * h)))
    else:
        # Exact erf GELU (matches torch.nn.GELU()).
        h = 0.5 * h * (1.0 + jax.lax.erf(h * 0.7071067811865476))

    # --- BertOutput: dense + bias + residual + LayerNorm (dropout = identity) ---
    y = jnp.dot(h.astype(jnp.bfloat16), w2_ref[...],
                preferred_element_type=jnp.float32)
    y = y + b2_ref[...] + x
    mean = jnp.mean(y, axis=-1, keepdims=True)
    yc = y - mean
    var = jnp.mean(yc * yc, axis=-1, keepdims=True)
    inv = jax.lax.rsqrt(var + eps)
    o_ref[...] = (yc * inv * gamma_ref[...] + beta_ref[...]).astype(o_ref.dtype)


def _round_up(x, m):
    return ((x + m - 1) // m) * m


def _vmem_budget_bytes():
    """Per-chip VMEM budget: ~0.8x physical capacity, 64 MiB (v7x) fallback."""
    cap = 64 << 20
    try:
        cap = int(pltpu.get_tpu_info().vmem_capacity_bytes)
    except Exception:   # emulator / API drift: keep the conservative fallback
        pass
    return max(min(int(cap * 0.8), cap - (12 << 20)), 16 << 20)


def _vmem_estimate_bytes(tm, h, i):
    """Everything the kernel keeps live in VMEM for one row tile."""
    weights = 2 * (h * i + i * h) * 2           # W1 + W2, bf16, double-buffered
    small = 2 * (i + 3 * h) * 4                 # b1, b2, gamma, beta (dbl-buffered)
    tiles = 2 * (tm * h * 4) * 2                # x and out tiles, double-buffered
    transients = tm * i * (4 + 2)               # fp32 GELU intermediate + bf16 copy
    transients += tm * h * (2 + 4 + 4 + 4)      # bf16 x, fp32 y, LayerNorm temps
    return weights + small + tiles + transients + (2 << 20)


def _choose_tile_rows(n_rows, h, i_size, budget):
    """Largest multiple-of-8 row tile (<= 512, <= padded rows) fitting budget."""
    tm = _round_up(min(n_rows, 512), 8)
    while tm > 8 and _vmem_estimate_bytes(tm, h, i_size) > budget:
        tm -= 8
    return tm


def prepare_params(params):
    """Pre-cast dense weights to bf16 once (MXU-native, half the DMA bytes)."""
    w1, b1, w2, b2, gamma, beta = params
    return (w1.astype(jnp.bfloat16), b1, w2.astype(jnp.bfloat16), b2, gamma, beta)


def bert_layer_ffn(att_out, params, *, eps=1e-12, tile_rows=None,
                   approximate_gelu=False):
    """att_out: [B, S, H] float32. Returns [B, S, H]."""
    B, S, H = att_out.shape
    w1, b1, w2, b2, gamma, beta = params
    I = w1.shape[1]

    # Weights should already be bf16 (prepare_params); cast only if needed so
    # the pre-cast path adds no per-call HBM traffic.
    if w1.dtype != jnp.bfloat16:
        w1 = w1.astype(jnp.bfloat16)
    if w2.dtype != jnp.bfloat16:
        w2 = w2.astype(jnp.bfloat16)

    N = B * S
    budget = _vmem_budget_bytes()
    if tile_rows is None:
        tile_rows = _choose_tile_rows(N, H, I, budget)
    assert tile_rows % 8 == 0, "tile_rows must be a multiple of 8"

    # Pad rows to a tile multiple (LayerNorm over zero pad rows stays finite;
    # padded rows are sliced off below).
    N_pad = _round_up(N, tile_rows)
    x2d = att_out.reshape(N, H)
    if N_pad != N:
        x2d = jnp.pad(x2d, ((0, N_pad - N), (0, 0)))
    n_row = N_pad // tile_rows

    # NOTE: if the resident bf16 weights alone exceed the budget (I far beyond
    # BERT sizes), this design should fall back to weight streaming.
    vmem_limit = int(min(max(_vmem_estimate_bytes(tile_rows, H, I) + (4 << 20),
                             32 << 20), budget))

    kernel = functools.partial(_bert_ffn_kernel, eps=eps,
                               approximate_gelu=approximate_gelu)

    out2d = pl.pallas_call(
        kernel,
        out_shape=jax.ShapeDtypeStruct((N_pad, H), att_out.dtype),
        grid_spec=pltpu.PrefetchScalarGridSpec(
            num_scalar_prefetch=0,
            grid=(n_row,),
            in_specs=[
                pl.BlockSpec((tile_rows, H), lambda i: (i, 0)),  # x / residual
                pl.BlockSpec((H, I), lambda i: (0, 0)),          # W1 (resident)
                pl.BlockSpec((1, I), lambda i: (0, 0)),          # b1
                pl.BlockSpec((I, H), lambda i: (0, 0)),          # W2 (resident)
                pl.BlockSpec((1, H), lambda i: (0, 0)),          # b2
                pl.BlockSpec((1, H), lambda i: (0, 0)),          # gamma
                pl.BlockSpec((1, H), lambda i: (0, 0)),          # beta
            ],
            out_specs=pl.BlockSpec((tile_rows, H), lambda i: (i, 0)),
        ),
        compiler_params=pltpu.CompilerParams(
            dimension_semantics=("parallel",),
            vmem_limit_bytes=vmem_limit),
    )(x2d, w1, b1, w2, b2, gamma, beta)

    if N_pad != N:
        out2d = out2d[:N]
    return out2d.reshape(B, S, H)


def init_params(key, emb_size, intermediate_size):
    k1, k2 = jax.random.split(key, 2)
    std = 0.02
    w1 = jax.random.normal(k1, (emb_size, intermediate_size), jnp.float32) * std
    b1 = jnp.zeros((1, intermediate_size), jnp.float32)
    w2 = jax.random.normal(k2, (intermediate_size, emb_size), jnp.float32) * std
    b2 = jnp.zeros((1, emb_size), jnp.float32)
    gamma = jnp.ones((1, emb_size), jnp.float32)
    beta = jnp.zeros((1, emb_size), jnp.float32)
    return w1, b1, w2, b2, gamma, beta


def _reference(att_out, params, eps=1e-12):
    """Pure-JAX fp32 reference of the same forward, for a sanity check."""
    w1, b1, w2, b2, gamma, beta = params
    h = att_out @ w1 + b1
    h = 0.5 * h * (1.0 + jax.lax.erf(h * 0.7071067811865476))
    y = h @ w2 + b2 + att_out
    mean = jnp.mean(y, axis=-1, keepdims=True)
    var = jnp.mean((y - mean) ** 2, axis=-1, keepdims=True)
    return (y - mean) * jax.lax.rsqrt(var + eps) * gamma + beta


if __name__ == "__main__":
    key = jax.random.PRNGKey(0)
    kx, kp = jax.random.split(key)

    # Small config: batch=2, seq=8, emb=128, intermediate=1024.
    B, S, EMB, INTER = 2, 8, 128, 1024
    att_out = jax.random.normal(kx, (B, S, EMB), jnp.float32)
    params = init_params(kp, EMB, INTER)
    kernel_params = prepare_params(params)     # one-time bf16 weight cast

    out = bert_layer_ffn(att_out, kernel_params)
    out = jax.block_until_ready(out)

    ref = _reference(att_out, params)
    assert out.shape == (B, S, EMB)
    # bf16 matmul inputs w/ fp32 accumulation -> loosened tolerance vs fp32 ref.
    assert jnp.allclose(out, ref, atol=2e-2, rtol=2e-2), (
        float(jnp.max(jnp.abs(out - ref))))

    print("KERNEL_OK")
</pallas_src>

<mosaic_0001>
module attributes {stable_mosaic.version = 11 : i64} {
  func.func @_bert_ffn_kernel(%arg0: i32, %arg1: memref<16x128xf32, #tpu.memory_space<vmem>>, %arg2: memref<128x1024xbf16, #tpu.memory_space<vmem>>, %arg3: memref<1x1024xf32, #tpu.memory_space<vmem>>, %arg4: memref<1024x128xbf16, #tpu.memory_space<vmem>>, %arg5: memref<1x128xf32, #tpu.memory_space<vmem>>, %arg6: memref<1x128xf32, #tpu.memory_space<vmem>>, %arg7: memref<1x128xf32, #tpu.memory_space<vmem>>, %arg8: memref<16x128xf32, #tpu.memory_space<vmem>>) attributes {dimension_semantics = [#tpu.dimension_semantics<parallel>], iteration_bounds = array<i64: 1>, scalar_prefetch = 0 : i64, scratch_operands = 0 : i64, tpu.core_type = #tpu.core_type<tc>, window_params = [{transform_indices = @transform_0, window_bounds = array<i64: 16, 128>}, {pipeline_mode = #tpu.pipeline_mode<synchronous>, transform_indices = @transform_1, window_bounds = array<i64: 128, 1024>}, {pipeline_mode = #tpu.pipeline_mode<synchronous>, transform_indices = @transform_2, window_bounds = array<i64: 1, 1024>}, {pipeline_mode = #tpu.pipeline_mode<synchronous>, transform_indices = @transform_3, window_bounds = array<i64: 1024, 128>}, {pipeline_mode = #tpu.pipeline_mode<synchronous>, transform_indices = @transform_4, window_bounds = array<i64: 1, 128>}, {pipeline_mode = #tpu.pipeline_mode<synchronous>, transform_indices = @transform_5, window_bounds = array<i64: 1, 128>}, {pipeline_mode = #tpu.pipeline_mode<synchronous>, transform_indices = @transform_6, window_bounds = array<i64: 1, 128>}, {transform_indices = @transform_7, window_bounds = array<i64: 16, 128>}]} {
    %c0 = arith.constant 0 : index
    %c0_0 = arith.constant 0 : index
    %0 = vector.load %arg1[%c0, %c0_0] : memref<16x128xf32, #tpu.memory_space<vmem>>, vector<16x128xf32>
    %1 = arith.truncf %0 : vector<16x128xf32> to vector<16x128xbf16>
    %c0_1 = arith.constant 0 : index
    %c0_2 = arith.constant 0 : index
    %2 = vector.load %arg2[%c0_1, %c0_2] : memref<128x1024xbf16, #tpu.memory_space<vmem>>, vector<128x1024xbf16>
    %cst = arith.constant dense<0.000000e+00> : vector<16x1024xf32>
    %3 = tpu.matmul %1, %2, %cst {dimension_numbers = #tpu.dot_dimension_numbers<[1], [0], [0], [1], [0, 0, 1, 1], [], []>} : vector<16x128xbf16>, vector<128x1024xbf16>, vector<16x1024xf32> -> vector<16x1024xf32>
    %c0_3 = arith.constant 0 : index
    %c0_4 = arith.constant 0 : index
    %4 = vector.load %arg3[%c0_3, %c0_4] : memref<1x1024xf32, #tpu.memory_space<vmem>>, vector<1x1024xf32>
    %5 = vector.broadcast %4 : vector<1x1024xf32> to vector<16x1024xf32>
    %6 = arith.addf %3, %5 : vector<16x1024xf32>
    %cst_5 = arith.constant 5.000000e-01 : f32
    %7 = vector.broadcast %cst_5 : f32 to vector<16x1024xf32>
    %8 = arith.mulf %7, %6 : vector<16x1024xf32>
    %cst_6 = arith.constant 0.707106769 : f32
    %9 = vector.broadcast %cst_6 : f32 to vector<16x1024xf32>
    %10 = arith.mulf %6, %9 : vector<16x1024xf32>
    %11 = math.erf %10 : vector<16x1024xf32>
    %cst_7 = arith.constant 1.000000e+00 : f32
    %12 = vector.broadcast %cst_7 : f32 to vector<16x1024xf32>
    %13 = arith.addf %12, %11 : vector<16x1024xf32>
    %14 = arith.mulf %8, %13 : vector<16x1024xf32>
    %15 = arith.truncf %14 : vector<16x1024xf32> to vector<16x1024xbf16>
    %c0_8 = arith.constant 0 : index
    %c0_9 = arith.constant 0 : index
    %16 = vector.load %arg4[%c0_8, %c0_9] : memref<1024x128xbf16, #tpu.memory_space<vmem>>, vector<1024x128xbf16>
    %cst_10 = arith.constant dense<0.000000e+00> : vector<16x128xf32>
    %17 = tpu.matmul %15, %16, %cst_10 {dimension_numbers = #tpu.dot_dimension_numbers<[1], [0], [0], [1], [0, 0, 1, 1], [], []>} : vector<16x1024xbf16>, vector<1024x128xbf16>, vector<16x128xf32> -> vector<16x128xf32>
    %c0_11 = arith.constant 0 : index
    %c0_12 = arith.constant 0 : index
    %18 = vector.load %arg5[%c0_11, %c0_12] : memref<1x128xf32, #tpu.memory_space<vmem>>, vector<1x128xf32>
    %19 = vector.broadcast %18 : vector<1x128xf32> to vector<16x128xf32>
    %20 = arith.addf %17, %19 : vector<16x128xf32>
    %21 = arith.addf %20, %0 : vector<16x128xf32>
    %cst_13 = arith.constant dense<0.000000e+00> : vector<16xf32>
    %22 = vector.multi_reduction <add>, %21, %cst_13 [1] : vector<16x128xf32> to vector<16xf32>
    %23 = vector.shape_cast %22 : vector<16xf32> to vector<16x1xf32>
    %cst_14 = arith.constant 1.280000e+02 : f32
    %24 = vector.broadcast %cst_14 : f32 to vector<16x1xf32>
    %25 = arith.divf %23, %24 : vector<16x1xf32>
    %26 = vector.broadcast %25 : vector<16x1xf32> to vector<16x128xf32>
    %27 = arith.subf %21, %26 : vector<16x128xf32>
    %28 = arith.mulf %27, %27 : vector<16x128xf32>
    %cst_15 = arith.constant dense<0.000000e+00> : vector<16xf32>
    %29 = vector.multi_reduction <add>, %28, %cst_15 [1] : vector<16x128xf32> to vector<16xf32>
    %30 = vector.shape_cast %29 : vector<16xf32> to vector<16x1xf32>
    %cst_16 = arith.constant 1.280000e+02 : f32
    %31 = vector.broadcast %cst_16 : f32 to vector<16x1xf32>
    %32 = arith.divf %30, %31 : vector<16x1xf32>
    %cst_17 = arith.constant 9.99999996E-13 : f32
    %33 = vector.broadcast %cst_17 : f32 to vector<16x1xf32>
    %34 = arith.addf %32, %33 : vector<16x1xf32>
    %35 = math.rsqrt %34 : vector<16x1xf32>
    %36 = vector.broadcast %35 : vector<16x1xf32> to vector<16x128xf32>
    %37 = arith.mulf %27, %36 : vector<16x128xf32>
    %c0_18 = arith.constant 0 : index
    %c0_19 = arith.constant 0 : index
    %38 = vector.load %arg6[%c0_18, %c0_19] : memref<1x128xf32, #tpu.memory_space<vmem>>, vector<1x128xf32>
    %39 = vector.broadcast %38 : vector<1x128xf32> to vector<16x128xf32>
    %40 = arith.mulf %37, %39 : vector<16x128xf32>
    %c0_20 = arith.constant 0 : index
    %c0_21 = arith.constant 0 : index
    %41 = vector.load %arg7[%c0_20, %c0_21] : memref<1x128xf32, #tpu.memory_space<vmem>>, vector<1x128xf32>
    %42 = vector.broadcast %41 : vector<1x128xf32> to vector<16x128xf32>
    %43 = arith.addf %40, %42 : vector<16x128xf32>
    %c0_22 = arith.constant 0 : index
    %c0_23 = arith.constant 0 : index
    %44 = vector.load %arg8[%c0_22, %c0_23] : memref<16x128xf32, #tpu.memory_space<vmem>>, vector<16x128xf32>
    tpu.vector_store %arg8[%c0_22, %c0_23], %43 {strides = array<i32>} : memref<16x128xf32, #tpu.memory_space<vmem>>, vector<16x128xf32>,
    return
  }
  func.func @transform_0(%arg0: i32) -> (i32, i32) {
    %c0_i32 = arith.constant 0 : i32
    %c0_i32_0 = arith.constant 0 : i32
    return %arg0, %c0_i32 : i32, i32
  }
  func.func @transform_1(%arg0: i32) -> (i32, i32) {
    %c0_i32 = arith.constant 0 : i32
    %c0_i32_0 = arith.constant 0 : i32
    %c0_i32_1 = arith.constant 0 : i32
    return %c0_i32, %c0_i32_0 : i32, i32
  }
  func.func @transform_2(%arg0: i32) -> (i32, i32) {
    %c0_i32 = arith.constant 0 : i32
    %c0_i32_0 = arith.constant 0 : i32
    %c0_i32_1 = arith.constant 0 : i32
    return %c0_i32, %c0_i32_0 : i32, i32
  }
  func.func @transform_3(%arg0: i32) -> (i32, i32) {
    %c0_i32 = arith.constant 0 : i32
    %c0_i32_0 = arith.constant 0 : i32
    %c0_i32_1 = arith.constant 0 : i32
    return %c0_i32, %c0_i32_0 : i32, i32
  }
  func.func @transform_4(%arg0: i32) -> (i32, i32) {
    %c0_i32 = arith.constant 0 : i32
    %c0_i32_0 = arith.constant 0 : i32
    %c0_i32_1 = arith.constant 0 : i32
    return %c0_i32, %c0_i32_0 : i32, i32
  }
  func.func @transform_5(%arg0: i32) -> (i32, i32) {
    %c0_i32 = arith.constant 0 : i32
    %c0_i32_0 = arith.constant 0 : i32
    %c0_i32_1 = arith.constant 0 : i32
    return %c0_i32, %c0_i32_0 : i32, i32
  }
  func.func @transform_6(%arg0: i32) -> (i32, i32) {
    %c0_i32 = arith.constant 0 : i32
    %c0_i32_0 = arith.constant 0 : i32
    %c0_i32_1 = arith.constant 0 : i32
    return %c0_i32, %c0_i32_0 : i32, i32
  }
  func.func @transform_7(%arg0: i32) -> (i32, i32) {
    %c0_i32 = arith.constant 0 : i32
    %c0_i32_0 = arith.constant 0 : i32
    return %arg0, %c0_i32 : i32, i32
  }
}

</mosaic_0001>

<llo_original>
// kernel: tpu_custom_call.1
$region0: #{tpu_custom_call.1}
  #allocation0 [shape = 'u32[]', space=smem, size = 0x4, offset = 0x4, fixed_abs, tag = 'smem constant byte address 0x4 - core index']
  #allocation1 [shape = 'u32[72,128]{1,0:T(1,128)}', space=vmem, size = 0x9000, scoped, tag = 'internal scratch']
  %s0 = inlined_call_operand.hbm [shape: f32[16,128], index: 0, kind: input, shape index: {}]
  %s1 = inlined_call_operand.hbm [shape: bf16[128,1024], index: 1, kind: input, shape index: {}]
  %s2 = inlined_call_operand.hbm [shape: f32[1,1024], index: 2, kind: input, shape index: {}]
  %s3 = inlined_call_operand.hbm [shape: bf16[1024,128], index: 3, kind: input, shape index: {}]
  %s4 = inlined_call_operand.vmem [shape: f32[1,128], index: 4, kind: input, shape index: {}]
  %s5 = inlined_call_operand.vmem [shape: f32[1,128], index: 5, kind: input, shape index: {}]
  %s6 = inlined_call_operand.vmem [shape: f32[1,128], index: 6, kind: input, shape index: {}]
  %s7 = inlined_call_operand.hbm [shape: f32[16,128], index: 7, kind: output, shape index: {}]
  %s8 = sld [smem:[#allocation0]]
  $region54: #{tpu_custom_call.1} parent=0
    _
  %s10 = ssub.s32 1, %s8
  %s11 = scalar_select 0, %s10, %s8
  $region1: #{tpu_custom_call.1} parent=0
    #allocation2 [shape = 'u8[8192]{0}', space=vmem, size = 0x2000, scoped, tag = 'input window, operand 0, single buffered']
    #allocation3 [shape = 's32[1]{0}', space=sflag, size = 0x4, scoped, tag = 'scoped memory for tpu_custom_call.1']
    #allocation4 [shape = 's32[1]{0}', space=sflag, size = 0x4, scoped, tag = 'scoped memory for tpu_custom_call.1']
    #allocation5 [shape = 'u8[262144]{0}', space=vmem, size = 0x40000, scoped, tag = 'input window, operand 1, single buffered']
    #allocation6 [shape = 's32[1]{0}', space=sflag, size = 0x4, scoped, tag = 'scoped memory for tpu_custom_call.1']
    #allocation7 [shape = 'u8[4096]{0}', space=vmem, size = 0x1000, scoped, tag = 'input window, operand 2, single buffered']
    #allocation8 [shape = 'u8[262144]{0}', space=vmem, size = 0x40000, scoped, tag = 'input window, operand 3, single buffered']
    #allocation9 [shape = 's32[1]{0}', space=sflag, size = 0x4, scoped, tag = 'scoped memory for tpu_custom_call.1']
    #allocation10 [shape = 'u8[8192]{0}', space=vmem, size = 0x2000, scoped, tag = 'output window, operand 0, single buffered']
    %12 = vsyncpa [#allocation3], 0
    %13 = vsyncpa [#allocation6], 0
    %14 = vsyncpa [#allocation9], 0
    %15 = vsyncpa [#allocation4], 0
    // Predicated region
    $region2: #{tpu_custom_call.1} parent=1 // pred_check
      _
    $region3: #{tpu_custom_call.1} parent=1 // pred_check_branch
      %17 = sbr.rel (0) target = $region5
    $region4: #{tpu_custom_call.1} parent=1 // pred_region
      %19 = vsyncadd [#allocation3], 0
      %s20 = sshll.u32 %s0, 4
      %s21 = int_to_ptr.hbm [resolvable:$true] %s20
      %s22 = sshll.u32 [#allocation2], 4
      %s23 = int_to_ptr.vmem [resolvable:$true] %s22
      %28 = dma.hbm_to_vmem [thread:$0]  %s21, 256, %s23, [#allocation3], 128, 128, 8
    $region5: #{tpu_custom_call.1} parent=1 // pred_fallthru
      _
    // Predicated region
    $region6: #{tpu_custom_call.1} parent=1 // pred_check
      _
    $region7: #{tpu_custom_call.1} parent=1 // pred_check_branch
      %30 = sbr.rel (0) target = $region9
    $region8: #{tpu_custom_call.1} parent=1 // pred_region
      %32 = vsyncadd [#allocation6], 0
      %s33 = sshll.u32 %s1, 4
      %s34 = int_to_ptr.hbm [resolvable:$true] %s33
      %s35 = sshll.u32 [#allocation5], 4
      %s36 = int_to_ptr.vmem [resolvable:$true] %s35
      %41 = dma.hbm_to_vmem [thread:$0]  %s34, 8192, %s36, [#allocation6], 512, 512, 32
    $region9: #{tpu_custom_call.1} parent=1 // pred_fallthru
      _
    // Predicated region
    $region10: #{tpu_custom_call.1} parent=1 // pred_check
      _
    $region11: #{tpu_custom_call.1} parent=1 // pred_check_branch
      %43 = sbr.rel (0) target = $region13
    $region12: #{tpu_custom_call.1} parent=1 // pred_region
      %45 = vsyncadd [#allocation6], 0
      %s47 = sshll.u32 %s2, 4
      %s48 = int_to_ptr.hbm [resolvable:$true] %s47
      %s49 = sshll.u32 [#allocation7], 4
      %s50 = int_to_ptr.vmem [resolvable:$true] %s49
      %52 = dma.hbm_to_vmem [thread:$0]  %s48, 128, %s50, [#allocation6]
    $region13: #{tpu_custom_call.1} parent=1 // pred_fallthru
      _
    // Predicated region
    $region14: #{tpu_custom_call.1} parent=1 // pred_check
      _
    $region15: #{tpu_custom_call.1} parent=1 // pred_check_branch
      %54 = sbr.rel (0) target = $region17
    $region16: #{tpu_custom_call.1} parent=1 // pred_region
      %56 = vsyncadd [#allocation9], 0
      %s57 = sshll.u32 %s3, 4
      %s58 = int_to_ptr.hbm [resolvable:$true] %s57
      %s59 = sshll.u32 [#allocation8], 4
      %s60 = int_to_ptr.vmem [resolvable:$true] %s59
      %65 = dma.hbm_to_vmem [thread:$0]  %s58, 8192, %s60, [#allocation9], 64, 64, 4
    $region17: #{tpu_custom_call.1} parent=1 // pred_fallthru
      _
    // Predicated region
    $region18: #{tpu_custom_call.1} parent=1 // pred_check
      _
    $region19: #{tpu_custom_call.1} parent=1 // pred_check_branch
      %67 = sbr.rel (0) target = $region21
    $region20: #{tpu_custom_call.1} parent=1 // pred_region
      _
    $region21: #{tpu_custom_call.1} parent=1 // pred_fallthru
      _
    // Predicated region
    $region22: #{tpu_custom_call.1} parent=1 // pred_check
      _
    $region23: #{tpu_custom_call.1} parent=1 // pred_check_branch
      %69 = sbr.rel (0) target = $region25
    $region24: #{tpu_custom_call.1} parent=1 // pred_region
      _
    $region25: #{tpu_custom_call.1} parent=1 // pred_fallthru
      _
    // Predicated region
    $region26: #{tpu_custom_call.1} parent=1 // pred_check
      _
    $region27: #{tpu_custom_call.1} parent=1 // pred_check_branch
      %71 = sbr.rel (0) target = $region29
    $region28: #{tpu_custom_call.1} parent=1 // pred_region
      _
    $region29: #{tpu_custom_call.1} parent=1 // pred_fallthru
      _
    // Predicated region
    $region30: #{tpu_custom_call.1} parent=1 // pred_check
      _
    $region31: #{tpu_custom_call.1} parent=1 // pred_check_branch
      %73 = sbr.rel (0) target = $region33
    $region32: #{tpu_custom_call.1} parent=1 // pred_region
      %75 = dma.done [#allocation3], 256
    $region33: #{tpu_custom_call.1} parent=1 // pred_fallthru
      _
    // Predicated region
    $region34: #{tpu_custom_call.1} parent=1 // pred_check
      _
    $region35: #{tpu_custom_call.1} parent=1 // pred_check_branch
      %77 = sbr.rel (0) target = $region37
    $region36: #{tpu_custom_call.1} parent=1 // pred_region
      %79 = dma.done [#allocation6], 8192
    $region37: #{tpu_custom_call.1} parent=1 // pred_fallthru
      _
    // Predicated region
    $region38: #{tpu_custom_call.1} parent=1 // pred_check
      _
    $region39: #{tpu_custom_call.1} parent=1 // pred_check_branch
      %81 = sbr.rel (0) target = $region41
    $region40: #{tpu_custom_call.1} parent=1 // pred_region
      %83 = dma.done [#allocation6], 128
    $region41: #{tpu_custom_call.1} parent=1 // pred_fallthru
      _
    // Predicated region
    $region42: #{tpu_custom_call.1} parent=1 // pred_check
      _
    $region43: #{tpu_custom_call.1} parent=1 // pred_check_branch
      %85 = sbr.rel (0) target = $region45
    $region44: #{tpu_custom_call.1} parent=1 // pred_region
      %87 = dma.done [#allocation9], 8192
    $region45: #{tpu_custom_call.1} parent=1 // pred_fallthru
      _
    %v88 = vld [vmem:[#allocation2] sm:$0xff]
    %v89 = vld [vmem:[#allocation2 + $0x8] sm:$0xff]
    %v90 = vpack.c.bf16 %v89, %v88
    %v91 = vld [vmem:[#allocation5] sm:$0xff]
    %v92 = vld [vmem:[#allocation5 + $0x8] sm:$0xff]
    %v93 = vld [vmem:[#allocation5 + $0x10] sm:$0xff]
    %v94 = vld [vmem:[#allocation5 + $0x18] sm:$0xff]
    %v95 = vld [vmem:[#allocation5 + $0x20] sm:$0xff]
    %v96 = vld [vmem:[#allocation5 + $0x28] sm:$0xff]
    %v97 = vld [vmem:[#allocation5 + $0x30] sm:$0xff]
    %v98 = vld [vmem:[#allocation5 + $0x38] sm:$0xff]
    %v99 = vld [vmem:[#allocation5 + $0x40] sm:$0xff]
    %v100 = vld [vmem:[#allocation5 + $0x48] sm:$0xff]
    %v101 = vld [vmem:[#allocation5 + $0x50] sm:$0xff]
    %v102 = vld [vmem:[#allocation5 + $0x58] sm:$0xff]
    %v103 = vld [vmem:[#allocation5 + $0x60] sm:$0xff]
    %v104 = vld [vmem:[#allocation5 + $0x68] sm:$0xff]
    %v105 = vld [vmem:[#allocation5 + $0x70] sm:$0xff]
    %v106 = vld [vmem:[#allocation5 + $0x78] sm:$0xff]
    %v107 = vld [vmem:[#allocation5 + $0x80] sm:$0xff]
    %v108 = vld [vmem:[#allocation5 + $0x88] sm:$0xff]
    %v109 = vld [vmem:[#allocation5 + $0x90] sm:$0xff]
    %v110 = vld [vmem:[#allocation5 + $0x98] sm:$0xff]
    %v111 = vld [vmem:[#allocation5 + $0xa0] sm:$0xff]
    %v112 = vld [vmem:[#allocation5 + $0xa8] sm:$0xff]
    %v113 = vld [vmem:[#allocation5 + $0xb0] sm:$0xff]
    %v114 = vld [vmem:[#allocation5 + $0xb8] sm:$0xff]
    %v115 = vld [vmem:[#allocation5 + $0xc0] sm:$0xff]
    %v116 = vld [vmem:[#allocation5 + $0xc8] sm:$0xff]
    %v117 = vld [vmem:[#allocation5 + $0xd0] sm:$0xff]
    %v118 = vld [vmem:[#allocation5 + $0xd8] sm:$0xff]
    %v119 = vld [vmem:[#allocation5 + $0xe0] sm:$0xff]
    %v120 = vld [vmem:[#allocation5 + $0xe8] sm:$0xff]
    %v121 = vld [vmem:[#allocation5 + $0xf0] sm:$0xff]
    %v122 = vld [vmem:[#allocation5 + $0xf8] sm:$0xff]
    %v123 = vld [vmem:[#allocation5 + $0x100] sm:$0xff]
    %v124 = vld [vmem:[#allocation5 + $0x108] sm:$0xff]
    %v125 = vld [vmem:[#allocation5 + $0x110] sm:$0xff]
    %v126 = vld [vmem:[#allocation5 + $0x118] sm:$0xff]
    %v127 = vld [vmem:[#allocation5 + $0x120] sm:$0xff]
    %v128 = vld [vmem:[#allocation5 + $0x128] sm:$0xff]
    %v129 = vld [vmem:[#allocation5 + $0x130] sm:$0xff]
    %v130 = vld [vmem:[#allocation5 + $0x138] sm:$0xff]
    %v131 = vld [vmem:[#allocation5 + $0x140] sm:$0xff]
    %v132 = vld [vmem:[#allocation5 + $0x148] sm:$0xff]
    %v133 = vld [vmem:[#allocation5 + $0x150] sm:$0xff]
    %v134 = vld [vmem:[#allocation5 + $0x158] sm:$0xff]
    %v135 = vld [vmem:[#allocation5 + $0x160] sm:$0xff]
    %v136 = vld [vmem:[#allocation5 + $0x168] sm:$0xff]
    %v137 = vld [vmem:[#allocation5 + $0x170] sm:$0xff]
    %v138 = vld [vmem:[#allocation5 + $0x178] sm:$0xff]
    %v139 = vld [vmem:[#allocation5 + $0x180] sm:$0xff]
    %v140 = vld [vmem:[#allocation5 + $0x188] sm:$0xff]
    %v141 = vld [vmem:[#allocation5 + $0x190] sm:$0xff]
    %v142 = vld [vmem:[#allocation5 + $0x198] sm:$0xff]
    %v143 = vld [vmem:[#allocation5 + $0x1a0] sm:$0xff]
    %v144 = vld [vmem:[#allocation5 + $0x1a8] sm:$0xff]
    %v145 = vld [vmem:[#allocation5 + $0x1b0] sm:$0xff]
    %v146 = vld [vmem:[#allocation5 + $0x1b8] sm:$0xff]
    %v147 = vld [vmem:[#allocation5 + $0x1c0] sm:$0xff]
    %v148 = vld [vmem:[#allocation5 + $0x1c8] sm:$0xff]
    %v149 = vld [vmem:[#allocation5 + $0x1d0] sm:$0xff]
    %v150 = vld [vmem:[#allocation5 + $0x1d8] sm:$0xff]
    %v151 = vld [vmem:[#allocation5 + $0x1e0] sm:$0xff]
    %v152 = vld [vmem:[#allocation5 + $0x1e8] sm:$0xff]
    %v153 = vld [vmem:[#allocation5 + $0x1f0] sm:$0xff]
    %v154 = vld [vmem:[#allocation5 + $0x1f8] sm:$0xff]
    %v155 = vld [vmem:[#allocation7] sm:$0xff]
    %v157 = vperm.slane %v155, 0
    %v158 = vperm.slane %v155, 1
    %v159 = vperm.slane %v155, 2
    %v160 = vperm.slane %v155, 3
    %v161 = vperm.slane %v155, 4
    %v162 = vperm.slane %v155, 5
    %v163 = vperm.slane %v155, 6
    %v164 = vperm.slane %v155, 7
    %v237 = vunpack.c.l.b16 %v91
    %v238 = vunpack.c.h.b16 %v91
    %v239 = vunpack.c.l.b16 %v92
    %v240 = vunpack.c.h.b16 %v92
    %v241 = vunpack.c.l.b16 %v93
    %v242 = vunpack.c.h.b16 %v93
    %v243 = vunpack.c.l.b16 %v94
    %v244 = vunpack.c.h.b16 %v94
    %v245 = vunpack.c.l.b16 %v95
    %v246 = vunpack.c.h.b16 %v95
    %v247 = vunpack.c.l.b16 %v96
    %v248 = vunpack.c.h.b16 %v96
    %v249 = vunpack.c.l.b16 %v97
    %v250 = vunpack.c.h.b16 %v97
    %v251 = vunpack.c.l.b16 %v98
    %v252 = vunpack.c.h.b16 %v98
    %v253 = vunpack.c.l.b16 %v99
    %v254 = vunpack.c.h.b16 %v99
    %v255 = vunpack.c.l.b16 %v100
    %v256 = vunpack.c.h.b16 %v100
    %v257 = vunpack.c.l.b16 %v101
    %v258 = vunpack.c.h.b16 %v101
    %v259 = vunpack.c.l.b16 %v102
    %v260 = vunpack.c.h.b16 %v102
    %v261 = vunpack.c.l.b16 %v103
    %v262 = vunpack.c.h.b16 %v103
    %v263 = vunpack.c.l.b16 %v104
    %v264 = vunpack.c.h.b16 %v104
    %v265 = vunpack.c.l.b16 %v105
    %v266 = vunpack.c.h.b16 %v105
    %v267 = vunpack.c.l.b16 %v106
    %v268 = vunpack.c.h.b16 %v106
    %v269 = vunpack.c.l.b16 %v107
    %v270 = vunpack.c.h.b16 %v107
    %v271 = vunpack.c.l.b16 %v108
    %v272 = vunpack.c.h.b16 %v108
    %v273 = vunpack.c.l.b16 %v109
    %v274 = vunpack.c.h.b16 %v109
    %v275 = vunpack.c.l.b16 %v110
    %v276 = vunpack.c.h.b16 %v110
    %v277 = vunpack.c.l.b16 %v111
    %v278 = vunpack.c.h.b16 %v111
    %v279 = vunpack.c.l.b16 %v112
    %v280 = vunpack.c.h.b16 %v112
    %v281 = vunpack.c.l.b16 %v113
    %v282 = vunpack.c.h.b16 %v113
    %v283 = vunpack.c.l.b16 %v114
    %v284 = vunpack.c.h.b16 %v114
    %v285 = vunpack.c.l.b16 %v115
    %v286 = vunpack.c.h.b16 %v115
    %v287 = vunpack.c.l.b16 %v116
    %v288 = vunpack.c.h.b16 %v116
    %v289 = vunpack.c.l.b16 %v117
    %v290 = vunpack.c.h.b16 %v117
    %v291 = vunpack.c.l.b16 %v118
    %v292 = vunpack.c.h.b16 %v118
    %v293 = vunpack.c.l.b16 %v119
    %v294 = vunpack.c.h.b16 %v119
    %v295 = vunpack.c.l.b16 %v120
    %v296 = vunpack.c.h.b16 %v120
    %v297 = vunpack.c.l.b16 %v121
    %v298 = vunpack.c.h.b16 %v121
    %v299 = vunpack.c.l.b16 %v122
    %v300 = vunpack.c.h.b16 %v122
    %v301 = vunpack.c.l.b16 %v123
    %v302 = vunpack.c.h.b16 %v123
    %v303 = vunpack.c.l.b16 %v124
    %v304 = vunpack.c.h.b16 %v124
    %v305 = vunpack.c.l.b16 %v125
    %v306 = vunpack.c.h.b16 %v125
    %v307 = vunpack.c.l.b16 %v126
    %v308 = vunpack.c.h.b16 %v126
    %v309 = vunpack.c.l.b16 %v127
    %v310 = vunpack.c.h.b16 %v127
    %v311 = vunpack.c.l.b16 %v128
    %v312 = vunpack.c.h.b16 %v128
    %v313 = vunpack.c.l.b16 %v129
    %v314 = vunpack.c.h.b16 %v129
    %v315 = vunpack.c.l.b16 %v130
    %v316 = vunpack.c.h.b16 %v130
    %v317 = vunpack.c.l.b16 %v131
    %v318 = vunpack.c.h.b16 %v131
    %v319 = vunpack.c.l.b16 %v132
    %v320 = vunpack.c.h.b16 %v132
    %v321 = vunpack.c.l.b16 %v133
    %v322 = vunpack.c.h.b16 %v133
    %v323 = vunpack.c.l.b16 %v134
    %v324 = vunpack.c.h.b16 %v134
    %v325 = vunpack.c.l.b16 %v135
    %v326 = vunpack.c.h.b16 %v135
    %v327 = vunpack.c.l.b16 %v136
    %v328 = vunpack.c.h.b16 %v136
    %v329 = vunpack.c.l.b16 %v137
    %v330 = vunpack.c.h.b16 %v137
    %v331 = vunpack.c.l.b16 %v138
    %v332 = vunpack.c.h.b16 %v138
    %v333 = vunpack.c.l.b16 %v139
    %v334 = vunpack.c.h.b16 %v139
    %v335 = vunpack.c.l.b16 %v140
    %v336 = vunpack.c.h.b16 %v140
    %v337 = vunpack.c.l.b16 %v141
    %v338 = vunpack.c.h.b16 %v141
    %v339 = vunpack.c.l.b16 %v142
    %v340 = vunpack.c.h.b16 %v142
    %v341 = vunpack.c.l.b16 %v143
    %v342 = vunpack.c.h.b16 %v143
    %v343 = vunpack.c.l.b16 %v144
    %v344 = vunpack.c.h.b16 %v144
    %v345 = vunpack.c.l.b16 %v145
    %v346 = vunpack.c.h.b16 %v145
    %v347 = vunpack.c.l.b16 %v146
    %v348 = vunpack.c.h.b16 %v146
    %v349 = vunpack.c.l.b16 %v147
    %v350 = vunpack.c.h.b16 %v147
    %v351 = vunpack.c.l.b16 %v148
    %v352 = vunpack.c.h.b16 %v148
    %v353 = vunpack.c.l.b16 %v149
    %v354 = vunpack.c.h.b16 %v149
    %v355 = vunpack.c.l.b16 %v150
    %v356 = vunpack.c.h.b16 %v150
    %v357 = vunpack.c.l.b16 %v151
    %v358 = vunpack.c.h.b16 %v151
    %v359 = vunpack.c.l.b16 %v152
    %v360 = vunpack.c.h.b16 %v152
    %v361 = vunpack.c.l.b16 %v153
    %v362 = vunpack.c.h.b16 %v153
    %v363 = vunpack.c.l.b16 %v154
    %v364 = vunpack.c.h.b16 %v154
    %v365 = vpack.c.b16 %v245, %v237
    %v366 = vpack.c.b16 %v246, %v238
    %v367 = vpack.c.b16 %v247, %v239
    %v368 = vpack.c.b16 %v248, %v240
    %v369 = vpack.c.b16 %v249, %v241
    %v370 = vpack.c.b16 %v250, %v242
    %v371 = vpack.c.b16 %v251, %v243
    %v372 = vpack.c.b16 %v252, %v244
    %v373 = vpack.c.b16 %v261, %v253
    %v374 = vpack.c.b16 %v262, %v254
    %v375 = vpack.c.b16 %v263, %v255
    %v376 = vpack.c.b16 %v264, %v256
    %v377 = vpack.c.b16 %v265, %v257
    %v378 = vpack.c.b16 %v266, %v258
    %v379 = vpack.c.b16 %v267, %v259
    %v380 = vpack.c.b16 %v268, %v260
    %v381 = vpack.c.b16 %v277, %v269
    %v382 = vpack.c.b16 %v278, %v270
    %v383 = vpack.c.b16 %v279, %v271
    %v384 = vpack.c.b16 %v280, %v272
    %v385 = vpack.c.b16 %v281, %v273
    %v386 = vpack.c.b16 %v282, %v274
    %v387 = vpack.c.b16 %v283, %v275
    %v388 = vpack.c.b16 %v284, %v276
    %v389 = vpack.c.b16 %v293, %v285
    %v390 = vpack.c.b16 %v294, %v286
    %v391 = vpack.c.b16 %v295, %v287
    %v392 = vpack.c.b16 %v296, %v288
    %v393 = vpack.c.b16 %v297, %v289
    %v394 = vpack.c.b16 %v298, %v290
    %v395 = vpack.c.b16 %v299, %v291
    %v396 = vpack.c.b16 %v300, %v292
    %v397 = vpack.c.b16 %v309, %v301
    %v398 = vpack.c.b16 %v310, %v302
    %v399 = vpack.c.b16 %v311, %v303
    %v400 = vpack.c.b16 %v312, %v304
    %v401 = vpack.c.b16 %v313, %v305
    %v402 = vpack.c.b16 %v314, %v306
    %v403 = vpack.c.b16 %v315, %v307
    %v404 = vpack.c.b16 %v316, %v308
    %v405 = vpack.c.b16 %v325, %v317
    %v406 = vpack.c.b16 %v326, %v318
    %v407 = vpack.c.b16 %v327, %v319
    %v408 = vpack.c.b16 %v328, %v320
    %v409 = vpack.c.b16 %v329, %v321
    %v410 = vpack.c.b16 %v330, %v322
    %v411 = vpack.c.b16 %v331, %v323
    %v412 = vpack.c.b16 %v332, %v324
    %v413 = vpack.c.b16 %v341, %v333
    %v414 = vpack.c.b16 %v342, %v334
    %v415 = vpack.c.b16 %v343, %v335
    %v416 = vpack.c.b16 %v344, %v336
    %v417 = vpack.c.b16 %v345, %v337
    %v418 = vpack.c.b16 %v346, %v338
    %v419 = vpack.c.b16 %v347, %v339
    %v420 = vpack.c.b16 %v348, %v340
    %v421 = vpack.c.b16 %v357, %v349
    %v422 = vpack.c.b16 %v358, %v350
    %v423 = vpack.c.b16 %v359, %v351
    %v424 = vpack.c.b16 %v360, %v352
    %v425 = vpack.c.b16 %v361, %v353
    %v426 = vpack.c.b16 %v362, %v354
    %v427 = vpack.c.b16 %v363, %v355
    %v428 = vpack.c.b16 %v364, %v356
    %493 = vmatpush.bf16.msra.mxu0 %v421
    %494 = vmatpush.bf16.msra.mxu0 %v413
    %495 = vmatpush.bf16.msra.mxu0 %v405
    %496 = vmatpush.bf16.msra.mxu0 %v397
    %497 = vmatpush.bf16.msra.mxu0 %v389
    %498 = vmatpush.bf16.msra.mxu0 %v381
    %499 = vmatpush.bf16.msra.mxu0 %v373
    %500 = vmatpush.bf16.msra.mxu0 %v365
    %501 = vmatmul.bf16.gmra.mxu0 %v90
    %v502 = vpop.f32.mrf.mxu0
    %v503 = vadd.f32 %v157, %v502
    %v504 = vpop.f32.mrf.mxu0
    %v505 = vadd.f32 %v157, %v504
    %506 = vdwg.mxu0
    %507 = vmatpush.bf16.msra.mxu0 %v422
    %508 = vmatpush.bf16.msra.mxu0 %v414
    %509 = vmatpush.bf16.msra.mxu0 %v406
    %510 = vmatpush.bf16.msra.mxu0 %v398
    %511 = vmatpush.bf16.msra.mxu0 %v390
    %512 = vmatpush.bf16.msra.mxu0 %v382
    %513 = vmatpush.bf16.msra.mxu0 %v374
    %514 = vmatpush.bf16.msra.mxu0 %v366
    %515 = vmatmul.bf16.gmra.mxu0 %v90
    %v516 = vpop.f32.mrf.mxu0
    %v517 = vadd.f32 %v158, %v516
    %v518 = vpop.f32.mrf.mxu0
    %v519 = vadd.f32 %v158, %v518
    %520 = vdwg.mxu0
    %521 = vmatpush.bf16.msra.mxu0 %v423
    %522 = vmatpush.bf16.msra.mxu0 %v415
    %523 = vmatpush.bf16.msra.mxu0 %v407
    %524 = vmatpush.bf16.msra.mxu0 %v399
    %525 = vmatpush.bf16.msra.mxu0 %v391
    %526 = vmatpush.bf16.msra.mxu0 %v383
    %527 = vmatpush.bf16.msra.mxu0 %v375
    %528 = vmatpush.bf16.msra.mxu0 %v367
    %529 = vmatmul.bf16.gmra.mxu0 %v90
    %v530 = vpop.f32.mrf.mxu0
    %v531 = vadd.f32 %v159, %v530
    %v532 = vpop.f32.mrf.mxu0
    %v533 = vadd.f32 %v159, %v532
    %534 = vdwg.mxu0
    %535 = vmatpush.bf16.msra.mxu0 %v424
    %536 = vmatpush.bf16.msra.mxu0 %v416
    %537 = vmatpush.bf16.msra.mxu0 %v408
    %538 = vmatpush.bf16.msra.mxu0 %v400
    %539 = vmatpush.bf16.msra.mxu0 %v392
    %540 = vmatpush.bf16.msra.mxu0 %v384
    %541 = vmatpush.bf16.msra.mxu0 %v376
    %542 = vmatpush.bf16.msra.mxu0 %v368
    %543 = vmatmul.bf16.gmra.mxu0 %v90
    %v544 = vpop.f32.mrf.mxu0
    %v545 = vadd.f32 %v160, %v544
    %v546 = vpop.f32.mrf.mxu0
    %v547 = vadd.f32 %v160, %v546
    %548 = vdwg.mxu0
    %549 = vmatpush.bf16.msra.mxu0 %v425
    %550 = vmatpush.bf16.msra.mxu0 %v417
    %551 = vmatpush.bf16.msra.mxu0 %v409
    %552 = vmatpush.bf16.msra.mxu0 %v401
    %553 = vmatpush.bf16.msra.mxu0 %v393
    %554 = vmatpush.bf16.msra.mxu0 %v385
    %555 = vmatpush.bf16.msra.mxu0 %v377
    %556 = vmatpush.bf16.msra.mxu0 %v369
    %557 = vmatmul.bf16.gmra.mxu0 %v90
    %v558 = vpop.f32.mrf.mxu0
    %v559 = vadd.f32 %v161, %v558
    %v560 = vpop.f32.mrf.mxu0
    %v561 = vadd.f32 %v161, %v560
    %562 = vdwg.mxu0
    %563 = vmatpush.bf16.msra.mxu0 %v426
    %564 = vmatpush.bf16.msra.mxu0 %v418
    %565 = vmatpush.bf16.msra.mxu0 %v410
    %566 = vmatpush.bf16.msra.mxu0 %v402
    %567 = vmatpush.bf16.msra.mxu0 %v394
    %568 = vmatpush.bf16.msra.mxu0 %v386
    %569 = vmatpush.bf16.msra.mxu0 %v378
    %570 = vmatpush.bf16.msra.mxu0 %v370
    %571 = vmatmul.bf16.gmra.mxu0 %v90
    %v572 = vpop.f32.mrf.mxu0
    %v573 = vadd.f32 %v162, %v572
    %v574 = vpop.f32.mrf.mxu0
    %v575 = vadd.f32 %v162, %v574
    %576 = vdwg.mxu0
    %577 = vmatpush.bf16.msra.mxu0 %v427
    %578 = vmatpush.bf16.msra.mxu0 %v419
    %579 = vmatpush.bf16.msra.mxu0 %v411
    %580 = vmatpush.bf16.msra.mxu0 %v403
    %581 = vmatpush.bf16.msra.mxu0 %v395
    %582 = vmatpush.bf16.msra.mxu0 %v387
    %583 = vmatpush.bf16.msra.mxu0 %v379
    %584 = vmatpush.bf16.msra.mxu0 %v371
    %585 = vmatmul.bf16.gmra.mxu0 %v90
    %v586 = vpop.f32.mrf.mxu0
    %v587 = vadd.f32 %v163, %v586
    %v588 = vpop.f32.mrf.mxu0
    %v589 = vadd.f32 %v163, %v588
    %590 = vdwg.mxu0
    %591 = vmatpush.bf16.msra.mxu0 %v428
    %592 = vmatpush.bf16.msra.mxu0 %v420
    %593 = vmatpush.bf16.msra.mxu0 %v412
    %594 = vmatpush.bf16.msra.mxu0 %v404
    %595 = vmatpush.bf16.msra.mxu0 %v396
    %596 = vmatpush.bf16.msra.mxu0 %v388
    %597 = vmatpush.bf16.msra.mxu0 %v380
    %598 = vmatpush.bf16.msra.mxu0 %v372
    %599 = vmatmul.bf16.gmra.mxu0 %v90
    %v600 = vpop.f32.mrf.mxu0
    %v601 = vadd.f32 %v164, %v600
    %v602 = vpop.f32.mrf.mxu0
    %v603 = vadd.f32 %v164, %v602
    %604 = vdwg.mxu0
    %v605 = vmul.f32 %v503, 0.5
    %v606 = vmul.f32 %v517, 0.5
    %v607 = vmul.f32 %v531, 0.5
    %v608 = vmul.f32 %v545, 0.5
    %v609 = vmul.f32 %v559, 0.5
    %v610 = vmul.f32 %v573, 0.5
    %v611 = vmul.f32 %v587, 0.5
    %v612 = vmul.f32 %v601, 0.5
    %v613 = vmul.f32 %v505, 0.5
    %v614 = vmul.f32 %v519, 0.5
    %v615 = vmul.f32 %v533, 0.5
    %v616 = vmul.f32 %v547, 0.5
    %v617 = vmul.f32 %v561, 0.5
    %v618 = vmul.f32 %v575, 0.5
    %v619 = vmul.f32 %v589, 0.5
    %v620 = vmul.f32 %v603, 0.5
    %v621 = vmul.f32 %v503, 0.70710677
    %v622 = vmul.f32 %v517, 0.70710677
    %v623 = vmul.f32 %v531, 0.70710677
    %v624 = vmul.f32 %v545, 0.70710677
    %v625 = vmul.f32 %v559, 0.70710677
    %v626 = vmul.f32 %v573, 0.70710677
    %v627 = vmul.f32 %v587, 0.70710677
    %v628 = vmul.f32 %v601, 0.70710677
    %v629 = vmul.f32 %v505, 0.70710677
    %v630 = vmul.f32 %v519, 0.70710677
    %v631 = vmul.f32 %v533, 0.70710677
    %v632 = vmul.f32 %v547, 0.70710677
    %v633 = vmul.f32 %v561, 0.70710677
    %v634 = vmul.f32 %v575, 0.70710677
    %v635 = vmul.f32 %v589, 0.70710677
    %v636 = vmul.f32 %v603, 0.70710677
    %v637 = vmul.f32 %v621, %v621
    %v638 = vmin.f32 16.0, %v637
    %v639 = vmul.f32 %v638, 2.1237322e-06
    %v640 = vadd.f32 %v639, 0.00028619796
    %v641 = vmul.f32 %v638, %v640
    %v642 = vadd.f32 %v641, 0.0036580483
    %v643 = vmul.f32 %v638, %v642
    %v644 = vadd.f32 %v643, 0.05243302
    %v645 = vmul.f32 %v638, %v644
    %v646 = vadd.f32 %v645, 0.18741608
    %v647 = vmul.f32 %v638, %v646
    %v648 = vadd.f32 %v647, 1.1283791
    %v649 = vmul.f32 %v621, %v648
    %v650 = vmul.f32 %v638, 3.8918573e-05
    %v651 = vadd.f32 %v650, 0.001143296
    %v652 = vmul.f32 %v638, %v651
    %v653 = vadd.f32 %v652, 0.014752088
    %v654 = vmul.f32 %v638, %v653
    %v655 = vadd.f32 %v654, 0.112945676
    %v656 = vmul.f32 %v638, %v655
    %v657 = vadd.f32 %v656, 0.4994258
    %v658 = vmul.f32 %v638, %v657
    %v659 = vadd.f32 %v658, 1.0
    %v660 = vrcp.pop %v659
    %v661 = vmul.f32 %v659, %v660
    %v662 = vsub.f32 1.0, %v661
    %v663 = vmul.f32 %v660, %v662
    %v664 = vadd.f32 %v660, %v663
    %vm665 = vweird.f32 %v659
    %vm666 = vweird.f32 %v660
    %vm667 = vmor %vm665, %vm666
    %v668 = vsel %vm667, %v660, %v664
    %v669 = vand.u32 2147483647, %v659
    %vm670 = vcmp.eq.f32.partialorder %v669, 8.507059e+37
    %v671 = vand.u32 %v659, 2147483648
    %v672 = vor.u32 1.1754944e-38, %v671
    %v673 = vsel %vm670, %v672, %v668
    %v674 = vmul.f32 %v649, %v673
    %v675 = vmin.f32 %v674, 1.0
    %v676 = vmax.f32 %v675, -1.0
    %v677 = vmul.f32 %v622, %v622
    %v678 = vmin.f32 16.0, %v677
    %v679 = vmul.f32 %v678, 2.1237322e-06
    %v680 = vadd.f32 %v679, 0.00028619796
    %v681 = vmul.f32 %v678, %v680
    %v682 = vadd.f32 %v681, 0.0036580483
    %v683 = vmul.f32 %v678, %v682
    %v684 = vadd.f32 %v683, 0.05243302
    %v685 = vmul.f32 %v678, %v684
    %v686 = vadd.f32 %v685, 0.18741608
    %v687 = vmul.f32 %v678, %v686
    %v688 = vadd.f32 %v687, 1.1283791
    %v689 = vmul.f32 %v622, %v688
    %v690 = vmul.f32 %v678, 3.8918573e-05
    %v691 = vadd.f32 %v690, 0.001143296
    %v692 = vmul.f32 %v678, %v691
    %v693 = vadd.f32 %v692, 0.014752088
    %v694 = vmul.f32 %v678, %v693
    %v695 = vadd.f32 %v694, 0.112945676
    %v696 = vmul.f32 %v678, %v695
    %v697 = vadd.f32 %v696, 0.4994258
    %v698 = vmul.f32 %v678, %v697
    %v699 = vadd.f32 %v698, 1.0
    %v700 = vrcp.pop %v699
    %v701 = vmul.f32 %v699, %v700
    %v702 = vsub.f32 1.0, %v701
    %v703 = vmul.f32 %v700, %v702
    %v704 = vadd.f32 %v700, %v703
    %vm705 = vweird.f32 %v699
    %vm706 = vweird.f32 %v700
    %vm707 = vmor %vm705, %vm706
    %v708 = vsel %vm707, %v700, %v704
    %v709 = vand.u32 2147483647, %v699
    %vm710 = vcmp.eq.f32.partialorder %v709, 8.507059e+37
    %v711 = vand.u32 %v699, 2147483648
    %v712 = vor.u32 1.1754944e-38, %v711
    %v713 = vsel %vm710, %v712, %v708
    %v714 = vmul.f32 %v689, %v713
    %v715 = vmin.f32 %v714, 1.0
    %v716 = vmax.f32 %v715, -1.0
    %v717 = vmul.f32 %v623, %v623
    %v718 = vmin.f32 16.0, %v717
    %v719 = vmul.f32 %v718, 2.1237322e-06
    %v720 = vadd.f32 %v719, 0.00028619796
    %v721 = vmul.f32 %v718, %v720
    %v722 = vadd.f32 %v721, 0.0036580483
    %v723 = vmul.f32 %v718, %v722
    %v724 = vadd.f32 %v723, 0.05243302
    %v725 = vmul.f32 %v718, %v724
    %v726 = vadd.f32 %v725, 0.18741608
    %v727 = vmul.f32 %v718, %v726
    %v728 = vadd.f32 %v727, 1.1283791
    %v729 = vmul.f32 %v623, %v728
    %v730 = vmul.f32 %v718, 3.8918573e-05
    %v731 = vadd.f32 %v730, 0.001143296
    %v732 = vmul.f32 %v718, %v731
    %v733 = vadd.f32 %v732, 0.014752088
    %v734 = vmul.f32 %v718, %v733
    %v735 = vadd.f32 %v734, 0.112945676
    %v736 = vmul.f32 %v718, %v735
    %v737 = vadd.f32 %v736, 0.4994258
    %v738 = vmul.f32 %v718, %v737
    %v739 = vadd.f32 %v738, 1.0
    %v740 = vrcp.pop %v739
    %v741 = vmul.f32 %v739, %v740
    %v742 = vsub.f32 1.0, %v741
    %v743 = vmul.f32 %v740, %v742
    %v744 = vadd.f32 %v740, %v743
    %vm745 = vweird.f32 %v739
    %vm746 = vweird.f32 %v740
    %vm747 = vmor %vm745, %vm746
    %v748 = vsel %vm747, %v740, %v744
    %v749 = vand.u32 2147483647, %v739
    %vm750 = vcmp.eq.f32.partialorder %v749, 8.507059e+37
    %v751 = vand.u32 %v739, 2147483648
    %v752 = vor.u32 1.1754944e-38, %v751
    %v753 = vsel %vm750, %v752, %v748
    %v754 = vmul.f32 %v729, %v753
    %v755 = vmin.f32 %v754, 1.0
    %v756 = vmax.f32 %v755, -1.0
    %v757 = vmul.f32 %v624, %v624
    %v758 = vmin.f32 16.0, %v757
    %v759 = vmul.f32 %v758, 2.1237322e-06
    %v760 = vadd.f32 %v759, 0.00028619796
    %v761 = vmul.f32 %v758, %v760
    %v762 = vadd.f32 %v761, 0.0036580483
    %v763 = vmul.f32 %v758, %v762
    %v764 = vadd.f32 %v763, 0.05243302
    %v765 = vmul.f32 %v758, %v764
    %v766 = vadd.f32 %v765, 0.18741608
    %v767 = vmul.f32 %v758, %v766
    %v768 = vadd.f32 %v767, 1.1283791
    %v769 = vmul.f32 %v624, %v768
    %v770 = vmul.f32 %v758, 3.8918573e-05
    %v771 = vadd.f32 %v770, 0.001143296
    %v772 = vmul.f32 %v758, %v771
    %v773 = vadd.f32 %v772, 0.014752088
    %v774 = vmul.f32 %v758, %v773
    %v775 = vadd.f32 %v774, 0.112945676
    %v776 = vmul.f32 %v758, %v775
    %v777 = vadd.f32 %v776, 0.4994258
    %v778 = vmul.f32 %v758, %v777
    %v779 = vadd.f32 %v778, 1.0
    %v780 = vrcp.pop %v779
    %v781 = vmul.f32 %v779, %v780
    %v782 = vsub.f32 1.0, %v781
    %v783 = vmul.f32 %v780, %v782
    %v784 = vadd.f32 %v780, %v783
    %vm785 = vweird.f32 %v779
    %vm786 = vweird.f32 %v780
    %vm787 = vmor %vm785, %vm786
    %v788 = vsel %vm787, %v780, %v784
    %v789 = vand.u32 2147483647, %v779
    %vm790 = vcmp.eq.f32.partialorder %v789, 8.507059e+37
    %v791 = vand.u32 %v779, 2147483648
    %v792 = vor.u32 1.1754944e-38, %v791
    %v793 = vsel %vm790, %v792, %v788
    %v794 = vmul.f32 %v769, %v793
    %v795 = vmin.f32 %v794, 1.0
    %v796 = vmax.f32 %v795, -1.0
    %v797 = vmul.f32 %v625, %v625
    %v798 = vmin.f32 16.0, %v797
    %v799 = vmul.f32 %v798, 2.1237322e-06
    %v800 = vadd.f32 %v799, 0.00028619796
    %v801 = vmul.f32 %v798, %v800
    %v802 = vadd.f32 %v801, 0.0036580483
    %v803 = vmul.f32 %v798, %v802
    %v804 = vadd.f32 %v803, 0.05243302
    %v805 = vmul.f32 %v798, %v804
    %v806 = vadd.f32 %v805, 0.18741608
    %v807 = vmul.f32 %v798, %v806
    %v808 = vadd.f32 %v807, 1.1283791
    %v809 = vmul.f32 %v625, %v808
    %v810 = vmul.f32 %v798, 3.8918573e-05
    %v811 = vadd.f32 %v810, 0.001143296
    %v812 = vmul.f32 %v798, %v811
    %v813 = vadd.f32 %v812, 0.014752088
    %v814 = vmul.f32 %v798, %v813
    %v815 = vadd.f32 %v814, 0.112945676
    %v816 = vmul.f32 %v798, %v815
    %v817 = vadd.f32 %v816, 0.4994258
    %v818 = vmul.f32 %v798, %v817
    %v819 = vadd.f32 %v818, 1.0
    %v820 = vrcp.pop %v819
    %v821 = vmul.f32 %v819, %v820
    %v822 = vsub.f32 1.0, %v821
    %v823 = vmul.f32 %v820, %v822
    %v824 = vadd.f32 %v820, %v823
    %vm825 = vweird.f32 %v819
    %vm826 = vweird.f32 %v820
    %vm827 = vmor %vm825, %vm826
    %v828 = vsel %vm827, %v820, %v824
    %v829 = vand.u32 2147483647, %v819
    %vm830 = vcmp.eq.f32.partialorder %v829, 8.507059e+37
    %v831 = vand.u32 %v819, 2147483648
    %v832 = vor.u32 1.1754944e-38, %v831
    %v833 = vsel %vm830, %v832, %v828
    %v834 = vmul.f32 %v809, %v833
    %v835 = vmin.f32 %v834, 1.0
    %v836 = vmax.f32 %v835, -1.0
    %v837 = vmul.f32 %v626, %v626
    %v838 = vmin.f32 16.0, %v837
    %v839 = vmul.f32 %v838, 2.1237322e-06
    %v840 = vadd.f32 %v839, 0.00028619796
    %v841 = vmul.f32 %v838, %v840
    %v842 = vadd.f32 %v841, 0.0036580483
    %v843 = vmul.f32 %v838, %v842
    %v844 = vadd.f32 %v843, 0.05243302
    %v845 = vmul.f32 %v838, %v844
    %v846 = vadd.f32 %v845, 0.18741608
    %v847 = vmul.f32 %v838, %v846
    %v848 = vadd.f32 %v847, 1.1283791
    %v849 = vmul.f32 %v626, %v848
    %v850 = vmul.f32 %v838, 3.8918573e-05
    %v851 = vadd.f32 %v850, 0.001143296
    %v852 = vmul.f32 %v838, %v851
    %v853 = vadd.f32 %v852, 0.014752088
    %v854 = vmul.f32 %v838, %v853
    %v855 = vadd.f32 %v854, 0.112945676
    %v856 = vmul.f32 %v838, %v855
    %v857 = vadd.f32 %v856, 0.4994258
    %v858 = vmul.f32 %v838, %v857
    %v859 = vadd.f32 %v858, 1.0
    %v860 = vrcp.pop %v859
    %v861 = vmul.f32 %v859, %v860
    %v862 = vsub.f32 1.0, %v861
    %v863 = vmul.f32 %v860, %v862
    %v864 = vadd.f32 %v860, %v863
    %vm865 = vweird.f32 %v859
    %vm866 = vweird.f32 %v860
    %vm867 = vmor %vm865, %vm866
    %v868 = vsel %vm867, %v860, %v864
    %v869 = vand.u32 2147483647, %v859
    %vm870 = vcmp.eq.f32.partialorder %v869, 8.507059e+37
    %v871 = vand.u32 %v859, 2147483648
    %v872 = vor.u32 1.1754944e-38, %v871
    %v873 = vsel %vm870, %v872, %v868
    %v874 = vmul.f32 %v849, %v873
    %v875 = vmin.f32 %v874, 1.0
    %v876 = vmax.f32 %v875, -1.0
    %v877 = vmul.f32 %v627, %v627
    %v878 = vmin.f32 16.0, %v877
    %v879 = vmul.f32 %v878, 2.1237322e-06
    %v880 = vadd.f32 %v879, 0.00028619796
    %v881 = vmul.f32 %v878, %v880
    %v882 = vadd.f32 %v881, 0.0036580483
    %v883 = vmul.f32 %v878, %v882
    %v884 = vadd.f32 %v883, 0.05243302
    %v885 = vmul.f32 %v878, %v884
    %v886 = vadd.f32 %v885, 0.18741608
    %v887 = vmul.f32 %v878, %v886
    %v888 = vadd.f32 %v887, 1.1283791
    %v889 = vmul.f32 %v627, %v888
    %v890 = vmul.f32 %v878, 3.8918573e-05
    %v891 = vadd.f32 %v890, 0.001143296
    %v892 = vmul.f32 %v878, %v891
    %v893 = vadd.f32 %v892, 0.014752088
    %v894 = vmul.f32 %v878, %v893
    %v895 = vadd.f32 %v894, 0.112945676
    %v896 = vmul.f32 %v878, %v895
    %v897 = vadd.f32 %v896, 0.4994258
    %v898 = vmul.f32 %v878, %v897
    %v899 = vadd.f32 %v898, 1.0
    %v900 = vrcp.pop %v899
    %v901 = vmul.f32 %v899, %v900
    %v902 = vsub.f32 1.0, %v901
    %v903 = vmul.f32 %v900, %v902
    %v904 = vadd.f32 %v900, %v903
    %vm905 = vweird.f32 %v899
    %vm906 = vweird.f32 %v900
    %vm907 = vmor %vm905, %vm906
    %v908 = vsel %vm907, %v900, %v904
    %v909 = vand.u32 2147483647, %v899
    %vm910 = vcmp.eq.f32.partialorder %v909, 8.507059e+37
    %v911 = vand.u32 %v899, 2147483648
    %v912 = vor.u32 1.1754944e-38, %v911
    %v913 = vsel %vm910, %v912, %v908
    %v914 = vmul.f32 %v889, %v913
    %v915 = vmin.f32 %v914, 1.0
    %v916 = vmax.f32 %v915, -1.0
    %v917 = vmul.f32 %v628, %v628
    %v918 = vmin.f32 16.0, %v917
    %v919 = vmul.f32 %v918, 2.1237322e-06
    %v920 = vadd.f32 %v919, 0.00028619796
    %v921 = vmul.f32 %v918, %v920
    %v922 = vadd.f32 %v921, 0.0036580483
    %v923 = vmul.f32 %v918, %v922
    %v924 = vadd.f32 %v923, 0.05243302
    %v925 = vmul.f32 %v918, %v924
    %v926 = vadd.f32 %v925, 0.18741608
    %v927 = vmul.f32 %v918, %v926
    %v928 = vadd.f32 %v927, 1.1283791
    %v929 = vmul.f32 %v628, %v928
    %v930 = vmul.f32 %v918, 3.8918573e-05
    %v931 = vadd.f32 %v930, 0.001143296
    %v932 = vmul.f32 %v918, %v931
    %v933 = vadd.f32 %v932, 0.014752088
    %v934 = vmul.f32 %v918, %v933
    %v935 = vadd.f32 %v934, 0.112945676
    %v936 = vmul.f32 %v918, %v935
    %v937 = vadd.f32 %v936, 0.4994258
    %v938 = vmul.f32 %v918, %v937
    %v939 = vadd.f32 %v938, 1.0
    %v940 = vrcp.pop %v939
    %v941 = vmul.f32 %v939, %v940
    %v942 = vsub.f32 1.0, %v941
    %v943 = vmul.f32 %v940, %v942
    %v944 = vadd.f32 %v940, %v943
    %vm945 = vweird.f32 %v939
    %vm946 = vweird.f32 %v940
    %vm947 = vmor %vm945, %vm946
    %v948 = vsel %vm947, %v940, %v944
    %v949 = vand.u32 2147483647, %v939
    %vm950 = vcmp.eq.f32.partialorder %v949, 8.507059e+37
    %v951 = vand.u32 %v939, 2147483648
    %v952 = vor.u32 1.1754944e-38, %v951
    %v953 = vsel %vm950, %v952, %v948
    %v954 = vmul.f32 %v929, %v953
    %v955 = vmin.f32 %v954, 1.0
    %v956 = vmax.f32 %v955, -1.0
    %v957 = vmul.f32 %v629, %v629
    %v958 = vmin.f32 16.0, %v957
    %v959 = vmul.f32 %v958, 2.1237322e-06
    %v960 = vadd.f32 %v959, 0.00028619796
    %v961 = vmul.f32 %v958, %v960
    %v962 = vadd.f32 %v961, 0.0036580483
    %v963 = vmul.f32 %v958, %v962
    %v964 = vadd.f32 %v963, 0.05243302
    %v965 = vmul.f32 %v958, %v964
    %v966 = vadd.f32 %v965, 0.18741608
    %v967 = vmul.f32 %v958, %v966
    %v968 = vadd.f32 %v967, 1.1283791
    %v969 = vmul.f32 %v629, %v968
    %v970 = vmul.f32 %v958, 3.8918573e-05
    %v971 = vadd.f32 %v970, 0.001143296
    %v972 = vmul.f32 %v958, %v971
    %v973 = vadd.f32 %v972, 0.014752088
    %v974 = vmul.f32 %v958, %v973
    %v975 = vadd.f32 %v974, 0.112945676
    %v976 = vmul.f32 %v958, %v975
    %v977 = vadd.f32 %v976, 0.4994258
    %v978 = vmul.f32 %v958, %v977
    %v979 = vadd.f32 %v978, 1.0
    %v980 = vrcp.pop %v979
    %v981 = vmul.f32 %v979, %v980
    %v982 = vsub.f32 1.0, %v981
    %v983 = vmul.f32 %v980, %v982
    %v984 = vadd.f32 %v980, %v983
    %vm985 = vweird.f32 %v979
    %vm986 = vweird.f32 %v980
    %vm987 = vmor %vm985, %vm986
    %v988 = vsel %vm987, %v980, %v984
    %v989 = vand.u32 2147483647, %v979
    %vm990 = vcmp.eq.f32.partialorder %v989, 8.507059e+37
    %v991 = vand.u32 %v979, 2147483648
    %v992 = vor.u32 1.1754944e-38, %v991
    %v993 = vsel %vm990, %v992, %v988
    %v994 = vmul.f32 %v969, %v993
    %v995 = vmin.f32 %v994, 1.0
    %v996 = vmax.f32 %v995, -1.0
    %v997 = vmul.f32 %v630, %v630
    %v998 = vmin.f32 16.0, %v997
    %v999 = vmul.f32 %v998, 2.1237322e-06
    %v1000 = vadd.f32 %v999, 0.00028619796
    %v1001 = vmul.f32 %v998, %v1000
    %v1002 = vadd.f32 %v1001, 0.0036580483
    %v1003 = vmul.f32 %v998, %v1002
    %v1004 = vadd.f32 %v1003, 0.05243302
    %v1005 = vmul.f32 %v998, %v1004
    %v1006 = vadd.f32 %v1005, 0.18741608
    %v1007 = vmul.f32 %v998, %v1006
    %v1008 = vadd.f32 %v1007, 1.1283791
    %v1009 = vmul.f32 %v630, %v1008
    %v1010 = vmul.f32 %v998, 3.8918573e-05
    %v1011 = vadd.f32 %v1010, 0.001143296
    %v1012 = vmul.f32 %v998, %v1011
    %v1013 = vadd.f32 %v1012, 0.014752088
    %v1014 = vmul.f32 %v998, %v1013
    %v1015 = vadd.f32 %v1014, 0.112945676
    %v1016 = vmul.f32 %v998, %v1015
    %v1017 = vadd.f32 %v1016, 0.4994258
    %v1018 = vmul.f32 %v998, %v1017
    %v1019 = vadd.f32 %v1018, 1.0
    %v1020 = vrcp.pop %v1019
    %v1021 = vmul.f32 %v1019, %v1020
    %v1022 = vsub.f32 1.0, %v1021
    %v1023 = vmul.f32 %v1020, %v1022
    %v1024 = vadd.f32 %v1020, %v1023
    %vm1025 = vweird.f32 %v1019
    %vm1026 = vweird.f32 %v1020
    %vm1027 = vmor %vm1025, %vm1026
    %v1028 = vsel %vm1027, %v1020, %v1024
    %v1029 = vand.u32 2147483647, %v1019
    %vm1030 = vcmp.eq.f32.partialorder %v1029, 8.507059e+37
    %v1031 = vand.u32 %v1019, 2147483648
    %v1032 = vor.u32 1.1754944e-38, %v1031
    %v1033 = vsel %vm1030, %v1032, %v1028
    %v1034 = vmul.f32 %v1009, %v1033
    %v1035 = vmin.f32 %v1034, 1.0
    %v1036 = vmax.f32 %v1035, -1.0
    %v1037 = vmul.f32 %v631, %v631
    %v1038 = vmin.f32 16.0, %v1037
    %v1039 = vmul.f32 %v1038, 2.1237322e-06
    %v1040 = vadd.f32 %v1039, 0.00028619796
    %v1041 = vmul.f32 %v1038, %v1040
    %v1042 = vadd.f32 %v1041, 0.0036580483
    %v1043 = vmul.f32 %v1038, %v1042
    %v1044 = vadd.f32 %v1043, 0.05243302
    %v1045 = vmul.f32 %v1038, %v1044
    %v1046 = vadd.f32 %v1045, 0.18741608
    %v1047 = vmul.f32 %v1038, %v1046
    %v1048 = vadd.f32 %v1047, 1.1283791
    %v1049 = vmul.f32 %v631, %v1048
    %v1050 = vmul.f32 %v1038, 3.8918573e-05
    %v1051 = vadd.f32 %v1050, 0.001143296
    %v1052 = vmul.f32 %v1038, %v1051
    %v1053 = vadd.f32 %v1052, 0.014752088
    %v1054 = vmul.f32 %v1038, %v1053
    %v1055 = vadd.f32 %v1054, 0.112945676
    %v1056 = vmul.f32 %v1038, %v1055
    %v1057 = vadd.f32 %v1056, 0.4994258
    %v1058 = vmul.f32 %v1038, %v1057
    %v1059 = vadd.f32 %v1058, 1.0
    %v1060 = vrcp.pop %v1059
    %v1061 = vmul.f32 %v1059, %v1060
    %v1062 = vsub.f32 1.0, %v1061
    %v1063 = vmul.f32 %v1060, %v1062
    %v1064 = vadd.f32 %v1060, %v1063
    %vm1065 = vweird.f32 %v1059
    %vm1066 = vweird.f32 %v1060
    %vm1067 = vmor %vm1065, %vm1066
    %v1068 = vsel %vm1067, %v1060, %v1064
    %v1069 = vand.u32 2147483647, %v1059
    %vm1070 = vcmp.eq.f32.partialorder %v1069, 8.507059e+37
    %v1071 = vand.u32 %v1059, 2147483648
    %v1072 = vor.u32 1.1754944e-38, %v1071
    %v1073 = vsel %vm1070, %v1072, %v1068
    %v1074 = vmul.f32 %v1049, %v1073
    %v1075 = vmin.f32 %v1074, 1.0
    %v1076 = vmax.f32 %v1075, -1.0
    %v1077 = vmul.f32 %v632, %v632
    %v1078 = vmin.f32 16.0, %v1077
    %v1079 = vmul.f32 %v1078, 2.1237322e-06
    %v1080 = vadd.f32 %v1079, 0.00028619796
    %v1081 = vmul.f32 %v1078, %v1080
    %v1082 = vadd.f32 %v1081, 0.0036580483
    %v1083 = vmul.f32 %v1078, %v1082
    %v1084 = vadd.f32 %v1083, 0.05243302
    %v1085 = vmul.f32 %v1078, %v1084
    %v1086 = vadd.f32 %v1085, 0.18741608
    %v1087 = vmul.f32 %v1078, %v1086
    %v1088 = vadd.f32 %v1087, 1.1283791
    %v1089 = vmul.f32 %v632, %v1088
    %v1090 = vmul.f32 %v1078, 3.8918573e-05
    %v1091 = vadd.f32 %v1090, 0.001143296
    %v1092 = vmul.f32 %v1078, %v1091
    %v1093 = vadd.f32 %v1092, 0.014752088
    %v1094 = vmul.f32 %v1078, %v1093
    %v1095 = vadd.f32 %v1094, 0.112945676
    %v1096 = vmul.f32 %v1078, %v1095
    %v1097 = vadd.f32 %v1096, 0.4994258
    %v1098 = vmul.f32 %v1078, %v1097
    %v1099 = vadd.f32 %v1098, 1.0
    %v1100 = vrcp.pop %v1099
    %v1101 = vmul.f32 %v1099, %v1100
    %v1102 = vsub.f32 1.0, %v1101
    %v1103 = vmul.f32 %v1100, %v1102
    %v1104 = vadd.f32 %v1100, %v1103
    %vm1105 = vweird.f32 %v1099
    %vm1106 = vweird.f32 %v1100
    %vm1107 = vmor %vm1105, %vm1106
    %v1108 = vsel %vm1107, %v1100, %v1104
    %v1109 = vand.u32 2147483647, %v1099
    %vm1110 = vcmp.eq.f32.partialorder %v1109, 8.507059e+37
    %v1111 = vand.u32 %v1099, 2147483648
    %v1112 = vor.u32 1.1754944e-38, %v1111
    %v1113 = vsel %vm1110, %v1112, %v1108
    %v1114 = vmul.f32 %v1089, %v1113
    %v1115 = vmin.f32 %v1114, 1.0
    %v1116 = vmax.f32 %v1115, -1.0
    %v1117 = vmul.f32 %v633, %v633
    %v1118 = vmin.f32 16.0, %v1117
    %v1119 = vmul.f32 %v1118, 2.1237322e-06
    %v1120 = vadd.f32 %v1119, 0.00028619796
    %v1121 = vmul.f32 %v1118, %v1120
    %v1122 = vadd.f32 %v1121, 0.0036580483
    %v1123 = vmul.f32 %v1118, %v1122
    %v1124 = vadd.f32 %v1123, 0.05243302
    %v1125 = vmul.f32 %v1118, %v1124
    %v1126 = vadd.f32 %v1125, 0.18741608
    %v1127 = vmul.f32 %v1118, %v1126
    %v1128 = vadd.f32 %v1127, 1.1283791
    %v1129 = vmul.f32 %v633, %v1128
    %v1130 = vmul.f32 %v1118, 3.8918573e-05
    %v1131 = vadd.f32 %v1130, 0.001143296
    %v1132 = vmul.f32 %v1118, %v1131
    %v1133 = vadd.f32 %v1132, 0.014752088
    %v1134 = vmul.f32 %v1118, %v1133
    %v1135 = vadd.f32 %v1134, 0.112945676
    %v1136 = vmul.f32 %v1118, %v1135
    %v1137 = vadd.f32 %v1136, 0.4994258
    %v1138 = vmul.f32 %v1118, %v1137
    %v1139 = vadd.f32 %v1138, 1.0
    %v1140 = vrcp.pop %v1139
    %v1141 = vmul.f32 %v1139, %v1140
    %v1142 = vsub.f32 1.0, %v1141
    %v1143 = vmul.f32 %v1140, %v1142
    %v1144 = vadd.f32 %v1140, %v1143
    %vm1145 = vweird.f32 %v1139
    %vm1146 = vweird.f32 %v1140
    %vm1147 = vmor %vm1145, %vm1146
    %v1148 = vsel %vm1147, %v1140, %v1144
    %v1149 = vand.u32 2147483647, %v1139
    %vm1150 = vcmp.eq.f32.partialorder %v1149, 8.507059e+37
    %v1151 = vand.u32 %v1139, 2147483648
    %v1152 = vor.u32 1.1754944e-38, %v1151
    %v1153 = vsel %vm1150, %v1152, %v1148
    %v1154 = vmul.f32 %v1129, %v1153
    %v1155 = vmin.f32 %v1154, 1.0
    %v1156 = vmax.f32 %v1155, -1.0
    %v1157 = vmul.f32 %v634, %v634
    %v1158 = vmin.f32 16.0, %v1157
    %v1159 = vmul.f32 %v1158, 2.1237322e-06
    %v1160 = vadd.f32 %v1159, 0.00028619796
    %v1161 = vmul.f32 %v1158, %v1160
    %v1162 = vadd.f32 %v1161, 0.0036580483
    %v1163 = vmul.f32 %v1158, %v1162
    %v1164 = vadd.f32 %v1163, 0.05243302
    %v1165 = vmul.f32 %v1158, %v1164
    %v1166 = vadd.f32 %v1165, 0.18741608
    %v1167 = vmul.f32 %v1158, %v1166
    %v1168 = vadd.f32 %v1167, 1.1283791
    %v1169 = vmul.f32 %v634, %v1168
    %v1170 = vmul.f32 %v1158, 3.8918573e-05
    %v1171 = vadd.f32 %v1170, 0.001143296
    %v1172 = vmul.f32 %v1158, %v1171
    %v1173 = vadd.f32 %v1172, 0.014752088
    %v1174 = vmul.f32 %v1158, %v1173
    %v1175 = vadd.f32 %v1174, 0.112945676
    %v1176 = vmul.f32 %v1158, %v1175
    %v1177 = vadd.f32 %v1176, 0.4994258
    %v1178 = vmul.f32 %v1158, %v1177
    %v1179 = vadd.f32 %v1178, 1.0
    %v1180 = vrcp.pop %v1179
    %v1181 = vmul.f32 %v1179, %v1180
    %v1182 = vsub.f32 1.0, %v1181
    %v1183 = vmul.f32 %v1180, %v1182
    %v1184 = vadd.f32 %v1180, %v1183
    %vm1185 = vweird.f32 %v1179
    %vm1186 = vweird.f32 %v1180
    %vm1187 = vmor %vm1185, %vm1186
    %v1188 = vsel %vm1187, %v1180, %v1184
    %v1189 = vand.u32 2147483647, %v1179
    %vm1190 = vcmp.eq.f32.partialorder %v1189, 8.507059e+37
    %v1191 = vand.u32 %v1179, 2147483648
    %v1192 = vor.u32 1.1754944e-38, %v1191
    %v1193 = vsel %vm1190, %v1192, %v1188
    %v1194 = vmul.f32 %v1169, %v1193
    %v1195 = vmin.f32 %v1194, 1.0
    %v1196 = vmax.f32 %v1195, -1.0
    %v1197 = vmul.f32 %v635, %v635
    %v1198 = vmin.f32 16.0, %v1197
    %v1199 = vmul.f32 %v1198, 2.1237322e-06
    %v1200 = vadd.f32 %v1199, 0.00028619796
    %v1201 = vmul.f32 %v1198, %v1200
    %v1202 = vadd.f32 %v1201, 0.0036580483
    %v1203 = vmul.f32 %v1198, %v1202
    %v1204 = vadd.f32 %v1203, 0.05243302
    %v1205 = vmul.f32 %v1198, %v1204
    %v1206 = vadd.f32 %v1205, 0.18741608
    %v1207 = vmul.f32 %v1198, %v1206
    %v1208 = vadd.f32 %v1207, 1.1283791
    %v1209 = vmul.f32 %v635, %v1208
    %v1210 = vmul.f32 %v1198, 3.8918573e-05
    %v1211 = vadd.f32 %v1210, 0.001143296
    %v1212 = vmul.f32 %v1198, %v1211
    %v1213 = vadd.f32 %v1212, 0.014752088
    %v1214 = vmul.f32 %v1198, %v1213
    %v1215 = vadd.f32 %v1214, 0.112945676
    %v1216 = vmul.f32 %v1198, %v1215
    %v1217 = vadd.f32 %v1216, 0.4994258
    %v1218 = vmul.f32 %v1198, %v1217
    %v1219 = vadd.f32 %v1218, 1.0
    %v1220 = vrcp.pop %v1219
    %v1221 = vmul.f32 %v1219, %v1220
    %v1222 = vsub.f32 1.0, %v1221
    %v1223 = vmul.f32 %v1220, %v1222
    %v1224 = vadd.f32 %v1220, %v1223
    %vm1225 = vweird.f32 %v1219
    %vm1226 = vweird.f32 %v1220
    %vm1227 = vmor %vm1225, %vm1226
    %v1228 = vsel %vm1227, %v1220, %v1224
    %v1229 = vand.u32 2147483647, %v1219
    %vm1230 = vcmp.eq.f32.partialorder %v1229, 8.507059e+37
    %v1231 = vand.u32 %v1219, 2147483648
    %v1232 = vor.u32 1.1754944e-38, %v1231
    %v1233 = vsel %vm1230, %v1232, %v1228
    %v1234 = vmul.f32 %v1209, %v1233
    %v1235 = vmin.f32 %v1234, 1.0
    %v1236 = vmax.f32 %v1235, -1.0
    %v1237 = vmul.f32 %v636, %v636
    %v1238 = vmin.f32 16.0, %v1237
    %v1239 = vmul.f32 %v1238, 2.1237322e-06
    %v1240 = vadd.f32 %v1239, 0.00028619796
    %v1241 = vmul.f32 %v1238, %v1240
    %v1242 = vadd.f32 %v1241, 0.0036580483
    %v1243 = vmul.f32 %v1238, %v1242
    %v1244 = vadd.f32 %v1243, 0.05243302
    %v1245 = vmul.f32 %v1238, %v1244
    %v1246 = vadd.f32 %v1245, 0.18741608
    %v1247 = vmul.f32 %v1238, %v1246
    %v1248 = vadd.f32 %v1247, 1.1283791
    %v1249 = vmul.f32 %v636, %v1248
    %v1250 = vmul.f32 %v1238, 3.8918573e-05
    %v1251 = vadd.f32 %v1250, 0.001143296
    %v1252 = vmul.f32 %v1238, %v1251
    %v1253 = vadd.f32 %v1252, 0.014752088
    %v1254 = vmul.f32 %v1238, %v1253
    %v1255 = vadd.f32 %v1254, 0.112945676
    %v1256 = vmul.f32 %v1238, %v1255
    %v1257 = vadd.f32 %v1256, 0.4994258
    %v1258 = vmul.f32 %v1238, %v1257
    %v1259 = vadd.f32 %v1258, 1.0
    %v1260 = vrcp.pop %v1259
    %v1261 = vmul.f32 %v1259, %v1260
    %v1262 = vsub.f32 1.0, %v1261
    %v1263 = vmul.f32 %v1260, %v1262
    %v1264 = vadd.f32 %v1260, %v1263
    %vm1265 = vweird.f32 %v1259
    %vm1266 = vweird.f32 %v1260
    %vm1267 = vmor %vm1265, %vm1266
    %v1268 = vsel %vm1267, %v1260, %v1264
    %v1269 = vand.u32 2147483647, %v1259
    %vm1270 = vcmp.eq.f32.partialorder %v1269, 8.507059e+37
    %v1271 = vand.u32 %v1259, 2147483648
    %v1272 = vor.u32 1.1754944e-38, %v1271
    %v1273 = vsel %vm1270, %v1272, %v1268
    %v1274 = vmul.f32 %v1249, %v1273
    %v1275 = vmin.f32 %v1274, 1.0
    %v1276 = vmax.f32 %v1275, -1.0
    %v1277 = vadd.f32 %v676, 1.0
    %v1278 = vadd.f32 %v716, 1.0
    %v1279 = vadd.f32 %v756, 1.0
    %v1280 = vadd.f32 %v796, 1.0
    %v1281 = vadd.f32 %v836, 1.0
    %v1282 = vadd.f32 %v876, 1.0
    %v1283 = vadd.f32 %v916, 1.0
    %v1284 = vadd.f32 %v956, 1.0
    %v1285 = vadd.f32 %v996, 1.0
    %v1286 = vadd.f32 %v1036, 1.0
    %v1287 = vadd.f32 %v1076, 1.0
    %v1288 = vadd.f32 %v1116, 1.0
    %v1289 = vadd.f32 %v1156, 1.0
    %v1290 = vadd.f32 %v1196, 1.0
    %v1291 = vadd.f32 %v1236, 1.0
    %v1292 = vadd.f32 %v1276, 1.0
    %v1293 = vmul.f32 %v605, %v1277
    %v1294 = vmul.f32 %v606, %v1278
    %v1295 = vmul.f32 %v607, %v1279
    %v1296 = vmul.f32 %v608, %v1280
    %v1297 = vmul.f32 %v609, %v1281
    %v1298 = vmul.f32 %v610, %v1282
    %v1299 = vmul.f32 %v611, %v1283
    %v1300 = vmul.f32 %v612, %v1284
    %v1301 = vmul.f32 %v613, %v1285
    %v1302 = vmul.f32 %v614, %v1286
    %v1303 = vmul.f32 %v615, %v1287
    %v1304 = vmul.f32 %v616, %v1288
    %v1305 = vmul.f32 %v617, %v1289
    %v1306 = vmul.f32 %v618, %v1290
    %v1307 = vmul.f32 %v619, %v1291
    %v1308 = vmul.f32 %v620, %v1292
    %v1309 = vpack.c.bf16 %v1301, %v1293
    %v1310 = vpack.c.bf16 %v1302, %v1294
    %v1311 = vpack.c.bf16 %v1303, %v1295
    %v1312 = vpack.c.bf16 %v1304, %v1296
    %v1313 = vpack.c.bf16 %v1305, %v1297
    %v1314 = vpack.c.bf16 %v1306, %v1298
    %v1315 = vpack.c.bf16 %v1307, %v1299
    %v1316 = vpack.c.bf16 %v1308, %v1300
    %v1317 = vld [vmem:[#allocation8] sm:$0xf]
    %v1318 = vld [vmem:[#allocation8 + $0x4] sm:$0xf]
    %v1319 = vld [vmem:[#allocation8 + $0x8] sm:$0xf]
    %v1320 = vld [vmem:[#allocation8 + $0xc] sm:$0xf]
    %v1321 = vld [vmem:[#allocation8 + $0x10] sm:$0xf]
    %v1322 = vld [vmem:[#allocation8 + $0x14] sm:$0xf]
    %v1323 = vld [vmem:[#allocation8 + $0x18] sm:$0xf]
    %v1324 = vld [vmem:[#allocation8 + $0x1c] sm:$0xf]
    %v1325 = vld [vmem:[#allocation8 + $0x20] sm:$0xf]
    %v1326 = vld [vmem:[#allocation8 + $0x24] sm:$0xf]
    %v1327 = vld [vmem:[#allocation8 + $0x28] sm:$0xf]
    %v1328 = vld [vmem:[#allocation8 + $0x2c] sm:$0xf]
    %v1329 = vld [vmem:[#allocation8 + $0x30] sm:$0xf]
    %v1330 = vld [vmem:[#allocation8 + $0x34] sm:$0xf]
    %v1331 = vld [vmem:[#allocation8 + $0x38] sm:$0xf]
    %v1332 = vld [vmem:[#allocation8 + $0x3c] sm:$0xf]
    %v1333 = vld [vmem:[#allocation8 + $0x40] sm:$0xf]
    %v1334 = vld [vmem:[#allocation8 + $0x44] sm:$0xf]
    %v1335 = vld [vmem:[#allocation8 + $0x48] sm:$0xf]
    %v1336 = vld [vmem:[#allocation8 + $0x4c] sm:$0xf]
    %v1337 = vld [vmem:[#allocation8 + $0x50] sm:$0xf]
    %v1338 = vld [vmem:[#allocation8 + $0x54] sm:$0xf]
    %v1339 = vld [vmem:[#allocation8 + $0x58] sm:$0xf]
    %v1340 = vld [vmem:[#allocation8 + $0x5c] sm:$0xf]
    %v1341 = vld [vmem:[#allocation8 + $0x60] sm:$0xf]
    %v1342 = vld [vmem:[#allocation8 + $0x64] sm:$0xf]
    %v1343 = vld [vmem:[#allocation8 + $0x68] sm:$0xf]
    %v1344 = vld [vmem:[#allocation8 + $0x6c] sm:$0xf]
    %v1345 = vld [vmem:[#allocation8 + $0x70] sm:$0xf]
    %v1346 = vld [vmem:[#allocation8 + $0x74] sm:$0xf]
    %v1347 = vld [vmem:[#allocation8 + $0x78] sm:$0xf]
    %v1348 = vld [vmem:[#allocation8 + $0x7c] sm:$0xf]
    %v1349 = vld [vmem:[#allocation8 + $0x80] sm:$0xf]
    %v1350 = vld [vmem:[#allocation8 + $0x84] sm:$0xf]
    %v1351 = vld [vmem:[#allocation8 + $0x88] sm:$0xf]
    %v1352 = vld [vmem:[#allocation8 + $0x8c] sm:$0xf]
    %v1353 = vld [vmem:[#allocation8 + $0x90] sm:$0xf]
    %v1354 = vld [vmem:[#allocation8 + $0x94] sm:$0xf]
    %v1355 = vld [vmem:[#allocation8 + $0x98] sm:$0xf]
    %v1356 = vld [vmem:[#allocation8 + $0x9c] sm:$0xf]
    %v1357 = vld [vmem:[#allocation8 + $0xa0] sm:$0xf]
    %v1358 = vld [vmem:[#allocation8 + $0xa4] sm:$0xf]
    %v1359 = vld [vmem:[#allocation8 + $0xa8] sm:$0xf]
    %v1360 = vld [vmem:[#allocation8 + $0xac] sm:$0xf]
    %v1361 = vld [vmem:[#allocation8 + $0xb0] sm:$0xf]
    %v1362 = vld [vmem:[#allocation8 + $0xb4] sm:$0xf]
    %v1363 = vld [vmem:[#allocation8 + $0xb8] sm:$0xf]
    %v1364 = vld [vmem:[#allocation8 + $0xbc] sm:$0xf]
    %v1365 = vld [vmem:[#allocation8 + $0xc0] sm:$0xf]
    %v1366 = vld [vmem:[#allocation8 + $0xc4] sm:$0xf]
    %v1367 = vld [vmem:[#allocation8 + $0xc8] sm:$0xf]
    %v1368 = vld [vmem:[#allocation8 + $0xcc] sm:$0xf]
    %v1369 = vld [vmem:[#allocation8 + $0xd0] sm:$0xf]
    %v1370 = vld [vmem:[#allocation8 + $0xd4] sm:$0xf]
    %v1371 = vld [vmem:[#allocation8 + $0xd8] sm:$0xf]
    %v1372 = vld [vmem:[#allocation8 + $0xdc] sm:$0xf]
    %v1373 = vld [vmem:[#allocation8 + $0xe0] sm:$0xf]
    %v1374 = vld [vmem:[#allocation8 + $0xe4] sm:$0xf]
    %v1375 = vld [vmem:[#allocation8 + $0xe8] sm:$0xf]
    %v1376 = vld [vmem:[#allocation8 + $0xec] sm:$0xf]
    %v1377 = vld [vmem:[#allocation8 + $0xf0] sm:$0xf]
    %v1378 = vld [vmem:[#allocation8 + $0xf4] sm:$0xf]
    %v1379 = vld [vmem:[#allocation8 + $0xf8] sm:$0xf]
    %v1380 = vld [vmem:[#allocation8 + $0xfc] sm:$0xf]
    %v1381 = vld [vmem:[#allocation8 + $0x100] sm:$0xf]
    %v1382 = vld [vmem:[#allocation8 + $0x104] sm:$0xf]
    %v1383 = vld [vmem:[#allocation8 + $0x108] sm:$0xf]
    %v1384 = vld [vmem:[#allocation8 + $0x10c] sm:$0xf]
    %v1385 = vld [vmem:[#allocation8 + $0x110] sm:$0xf]
    %v1386 = vld [vmem:[#allocation8 + $0x114] sm:$0xf]
    %v1387 = vld [vmem:[#allocation8 + $0x118] sm:$0xf]
    %v1388 = vld [vmem:[#allocation8 + $0x11c] sm:$0xf]
    %v1389 = vld [vmem:[#allocation8 + $0x120] sm:$0xf]
    %v1390 = vld [vmem:[#allocation8 + $0x124] sm:$0xf]
    %v1391 = vld [vmem:[#allocation8 + $0x128] sm:$0xf]
    %v1392 = vld [vmem:[#allocation8 + $0x12c] sm:$0xf]
    %v1393 = vld [vmem:[#allocation8 + $0x130] sm:$0xf]
    %v1394 = vld [vmem:[#allocation8 + $0x134] sm:$0xf]
    %v1395 = vld [vmem:[#allocation8 + $0x138] sm:$0xf]
    %v1396 = vld [vmem:[#allocation8 + $0x13c] sm:$0xf]
    %v1397 = vld [vmem:[#allocation8 + $0x140] sm:$0xf]
    %v1398 = vld [vmem:[#allocation8 + $0x144] sm:$0xf]
    %v1399 = vld [vmem:[#allocation8 + $0x148] sm:$0xf]
    %v1400 = vld [vmem:[#allocation8 + $0x14c] sm:$0xf]
    %v1401 = vld [vmem:[#allocation8 + $0x150] sm:$0xf]
    %v1402 = vld [vmem:[#allocation8 + $0x154] sm:$0xf]
    %v1403 = vld [vmem:[#allocation8 + $0x158] sm:$0xf]
    %v1404 = vld [vmem:[#allocation8 + $0x15c] sm:$0xf]
    %v1405 = vld [vmem:[#allocation8 + $0x160] sm:$0xf]
    %v1406 = vld [vmem:[#allocation8 + $0x164] sm:$0xf]
    %v1407 = vld [vmem:[#allocation8 + $0x168] sm:$0xf]
    %v1408 = vld [vmem:[#allocation8 + $0x16c] sm:$0xf]
    %v1409 = vld [vmem:[#allocation8 + $0x170] sm:$0xf]
    %v1410 = vld [vmem:[#allocation8 + $0x174] sm:$0xf]
    %v1411 = vld [vmem:[#allocation8 + $0x178] sm:$0xf]
    %v1412 = vld [vmem:[#allocation8 + $0x17c] sm:$0xf]
    %v1413 = vld [vmem:[#allocation8 + $0x180] sm:$0xf]
    %v1414 = vld [vmem:[#allocation8 + $0x184] sm:$0xf]
    %v1415 = vld [vmem:[#allocation8 + $0x188] sm:$0xf]
    %v1416 = vld [vmem:[#allocation8 + $0x18c] sm:$0xf]
    %v1417 = vld [vmem:[#allocation8 + $0x190] sm:$0xf]
    %v1418 = vld [vmem:[#allocation8 + $0x194] sm:$0xf]
    %v1419 = vld [vmem:[#allocation8 + $0x198] sm:$0xf]
    %v1420 = vld [vmem:[#allocation8 + $0x19c] sm:$0xf]
    %v1421 = vld [vmem:[#allocation8 + $0x1a0] sm:$0xf]
    %v1422 = vld [vmem:[#allocation8 + $0x1a4] sm:$0xf]
    %v1423 = vld [vmem:[#allocation8 + $0x1a8] sm:$0xf]
    %v1424 = vld [vmem:[#allocation8 + $0x1ac] sm:$0xf]
    %v1425 = vld [vmem:[#allocation8 + $0x1b0] sm:$0xf]
    %v1426 = vld [vmem:[#allocation8 + $0x1b4] sm:$0xf]
    %v1427 = vld [vmem:[#allocation8 + $0x1b8] sm:$0xf]
    %v1428 = vld [vmem:[#allocation8 + $0x1bc] sm:$0xf]
    %v1429 = vld [vmem:[#allocation8 + $0x1c0] sm:$0xf]
    %v1430 = vld [vmem:[#allocation8 + $0x1c4] sm:$0xf]
    %v1431 = vld [vmem:[#allocation8 + $0x1c8] sm:$0xf]
    %v1432 = vld [vmem:[#allocation8 + $0x1cc] sm:$0xf]
    %v1433 = vld [vmem:[#allocation8 + $0x1d0] sm:$0xf]
    %v1434 = vld [vmem:[#allocation8 + $0x1d4] sm:$0xf]
    %v1435 = vld [vmem:[#allocation8 + $0x1d8] sm:$0xf]
    %v1436 = vld [vmem:[#allocation8 + $0x1dc] sm:$0xf]
    %v1437 = vld [vmem:[#allocation8 + $0x1e0] sm:$0xf]
    %v1438 = vld [vmem:[#allocation8 + $0x1e4] sm:$0xf]
    %v1439 = vld [vmem:[#allocation8 + $0x1e8] sm:$0xf]
    %v1440 = vld [vmem:[#allocation8 + $0x1ec] sm:$0xf]
    %v1441 = vld [vmem:[#allocation8 + $0x1f0] sm:$0xf]
    %v1442 = vld [vmem:[#allocation8 + $0x1f4] sm:$0xf]
    %v1443 = vld [vmem:[#allocation8 + $0x1f8] sm:$0xf]
    %v1444 = vld [vmem:[#allocation8 + $0x1fc] sm:$0xf]
    %v1445 = vld [vmem:[%s4] sm:$0x1]
    %v1447 = vperm.slane %v1445, 0
    %v1577 = vunpack.c.l.b16 %v1317
    %v1578 = vunpack.c.l.b16 %v1318
    %v1579 = vunpack.c.l.b16 %v1319
    %v1580 = vunpack.c.l.b16 %v1320
    %v1581 = vunpack.c.l.b16 %v1321
    %v1582 = vunpack.c.l.b16 %v1322
    %v1583 = vunpack.c.l.b16 %v1323
    %v1584 = vunpack.c.l.b16 %v1324
    %v1585 = vunpack.c.l.b16 %v1325
    %v1586 = vunpack.c.l.b16 %v1326
    %v1587 = vunpack.c.l.b16 %v1327
    %v1588 = vunpack.c.l.b16 %v1328
    %v1589 = vunpack.c.l.b16 %v1329
    %v1590 = vunpack.c.l.b16 %v1330
    %v1591 = vunpack.c.l.b16 %v1331
    %v1592 = vunpack.c.l.b16 %v1332
    %v1593 = vunpack.c.l.b16 %v1333
    %v1594 = vunpack.c.l.b16 %v1334
    %v1595 = vunpack.c.l.b16 %v1335
    %v1596 = vunpack.c.l.b16 %v1336
    %v1597 = vunpack.c.l.b16 %v1337
    %v1598 = vunpack.c.l.b16 %v1338
    %v1599 = vunpack.c.l.b16 %v1339
    %v1600 = vunpack.c.l.b16 %v1340
    %v1601 = vunpack.c.l.b16 %v1341
    %v1602 = vunpack.c.l.b16 %v1342
    %v1603 = vunpack.c.l.b16 %v1343
    %v1604 = vunpack.c.l.b16 %v1344
    %v1605 = vunpack.c.l.b16 %v1345
    %v1606 = vunpack.c.l.b16 %v1346
    %v1607 = vunpack.c.l.b16 %v1347
    %v1608 = vunpack.c.l.b16 %v1348
    %v1609 = vunpack.c.l.b16 %v1349
    %v1610 = vunpack.c.l.b16 %v1350
    %v1611 = vunpack.c.l.b16 %v1351
    %v1612 = vunpack.c.l.b16 %v1352
    %v1613 = vunpack.c.l.b16 %v1353
    %v1614 = vunpack.c.l.b16 %v1354
    %v1615 = vunpack.c.l.b16 %v1355
    %v1616 = vunpack.c.l.b16 %v1356
    %v1617 = vunpack.c.l.b16 %v1357
    %v1618 = vunpack.c.l.b16 %v1358
    %v1619 = vunpack.c.l.b16 %v1359
    %v1620 = vunpack.c.l.b16 %v1360
    %v1621 = vunpack.c.l.b16 %v1361
    %v1622 = vunpack.c.l.b16 %v1362
    %v1623 = vunpack.c.l.b16 %v1363
    %v1624 = vunpack.c.l.b16 %v1364
    %v1625 = vunpack.c.l.b16 %v1365
    %v1626 = vunpack.c.l.b16 %v1366
    %v1627 = vunpack.c.l.b16 %v1367
    %v1628 = vunpack.c.l.b16 %v1368
    %v1629 = vunpack.c.l.b16 %v1369
    %v1630 = vunpack.c.l.b16 %v1370
    %v1631 = vunpack.c.l.b16 %v1371
    %v1632 = vunpack.c.l.b16 %v1372
    %v1633 = vunpack.c.l.b16 %v1373
    %v1634 = vunpack.c.l.b16 %v1374
    %v1635 = vunpack.c.l.b16 %v1375
    %v1636 = vunpack.c.l.b16 %v1376
    %v1637 = vunpack.c.l.b16 %v1377
    %v1638 = vunpack.c.l.b16 %v1378
    %v1639 = vunpack.c.l.b16 %v1379
    %v1640 = vunpack.c.l.b16 %v1380
    %v1641 = vunpack.c.l.b16 %v1381
    %v1642 = vunpack.c.l.b16 %v1382
    %v1643 = vunpack.c.l.b16 %v1383
    %v1644 = vunpack.c.l.b16 %v1384
    %v1645 = vunpack.c.l.b16 %v1385
    %v1646 = vunpack.c.l.b16 %v1386
    %v1647 = vunpack.c.l.b16 %v1387
    %v1648 = vunpack.c.l.b16 %v1388
    %v1649 = vunpack.c.l.b16 %v1389
    %v1650 = vunpack.c.l.b16 %v1390
    %v1651 = vunpack.c.l.b16 %v1391
    %v1652 = vunpack.c.l.b16 %v1392
    %v1653 = vunpack.c.l.b16 %v1393
    %v1654 = vunpack.c.l.b16 %v1394
    %v1655 = vunpack.c.l.b16 %v1395
    %v1656 = vunpack.c.l.b16 %v1396
    %v1657 = vunpack.c.l.b16 %v1397
    %v1658 = vunpack.c.l.b16 %v1398
    %v1659 = vunpack.c.l.b16 %v1399
    %v1660 = vunpack.c.l.b16 %v1400
    %v1661 = vunpack.c.l.b16 %v1401
    %v1662 = vunpack.c.l.b16 %v1402
    %v1663 = vunpack.c.l.b16 %v1403
    %v1664 = vunpack.c.l.b16 %v1404
    %v1665 = vunpack.c.l.b16 %v1405
    %v1666 = vunpack.c.l.b16 %v1406
    %v1667 = vunpack.c.l.b16 %v1407
    %v1668 = vunpack.c.l.b16 %v1408
    %v1669 = vunpack.c.l.b16 %v1409
    %v1670 = vunpack.c.l.b16 %v1410
    %v1671 = vunpack.c.l.b16 %v1411
    %v1672 = vunpack.c.l.b16 %v1412
    %v1673 = vunpack.c.l.b16 %v1413
    %v1674 = vunpack.c.l.b16 %v1414
    %v1675 = vunpack.c.l.b16 %v1415
    %v1676 = vunpack.c.l.b16 %v1416
    %v1677 = vunpack.c.l.b16 %v1417
    %v1678 = vunpack.c.l.b16 %v1418
    %v1679 = vunpack.c.l.b16 %v1419
    %v1680 = vunpack.c.l.b16 %v1420
    %v1681 = vunpack.c.l.b16 %v1421
    %v1682 = vunpack.c.l.b16 %v1422
    %v1683 = vunpack.c.l.b16 %v1423
    %v1684 = vunpack.c.l.b16 %v1424
    %v1685 = vunpack.c.l.b16 %v1425
    %v1686 = vunpack.c.l.b16 %v1426
    %v1687 = vunpack.c.l.b16 %v1427
    %v1688 = vunpack.c.l.b16 %v1428
    %v1689 = vunpack.c.l.b16 %v1429
    %v1690 = vunpack.c.l.b16 %v1430
    %v1691 = vunpack.c.l.b16 %v1431
    %v1692 = vunpack.c.l.b16 %v1432
    %v1693 = vunpack.c.l.b16 %v1433
    %v1694 = vunpack.c.l.b16 %v1434
    %v1695 = vunpack.c.l.b16 %v1435
    %v1696 = vunpack.c.l.b16 %v1436
    %v1697 = vunpack.c.l.b16 %v1437
    %v1698 = vunpack.c.l.b16 %v1438
    %v1699 = vunpack.c.l.b16 %v1439
    %v1700 = vunpack.c.l.b16 %v1440
    %v1701 = vunpack.c.l.b16 %v1441
    %v1702 = vunpack.c.l.b16 %v1442
    %v1703 = vunpack.c.l.b16 %v1443
    %v1704 = vunpack.c.l.b16 %v1444
    %v1705 = vpack.c.b16 %v1578, %v1577
    %v1706 = vpack.c.b16 %v1580, %v1579
    %v1707 = vpack.c.b16 %v1582, %v1581
    %v1708 = vpack.c.b16 %v1584, %v1583
    %v1709 = vpack.c.b16 %v1586, %v1585
    %v1710 = vpack.c.b16 %v1588, %v1587
    %v1711 = vpack.c.b16 %v1590, %v1589
    %v1712 = vpack.c.b16 %v1592, %v1591
    %v1713 = vpack.c.b16 %v1594, %v1593
    %v1714 = vpack.c.b16 %v1596, %v1595
    %v1715 = vpack.c.b16 %v1598, %v1597
    %v1716 = vpack.c.b16 %v1600, %v1599
    %v1717 = vpack.c.b16 %v1602, %v1601
    %v1718 = vpack.c.b16 %v1604, %v1603
    %v1719 = vpack.c.b16 %v1606, %v1605
    %v1720 = vpack.c.b16 %v1608, %v1607
    %v1721 = vpack.c.b16 %v1610, %v1609
    %v1722 = vpack.c.b16 %v1612, %v1611
    %v1723 = vpack.c.b16 %v1614, %v1613
    %v1724 = vpack.c.b16 %v1616, %v1615
    %v1725 = vpack.c.b16 %v1618, %v1617
    %v1726 = vpack.c.b16 %v1620, %v1619
    %v1727 = vpack.c.b16 %v1622, %v1621
    %v1728 = vpack.c.b16 %v1624, %v1623
    %v1729 = vpack.c.b16 %v1626, %v1625
    %v1730 = vpack.c.b16 %v1628, %v1627
    %v1731 = vpack.c.b16 %v1630, %v1629
    %v1732 = vpack.c.b16 %v1632, %v1631
    %v1733 = vpack.c.b16 %v1634, %v1633
    %v1734 = vpack.c.b16 %v1636, %v1635
    %v1735 = vpack.c.b16 %v1638, %v1637
    %v1736 = vpack.c.b16 %v1640, %v1639
    %v1737 = vpack.c.b16 %v1642, %v1641
    %v1738 = vpack.c.b16 %v1644, %v1643
    %v1739 = vpack.c.b16 %v1646, %v1645
    %v1740 = vpack.c.b16 %v1648, %v1647
    %v1741 = vpack.c.b16 %v1650, %v1649
    %v1742 = vpack.c.b16 %v1652, %v1651
    %v1743 = vpack.c.b16 %v1654, %v1653
    %v1744 = vpack.c.b16 %v1656, %v1655
    %v1745 = vpack.c.b16 %v1658, %v1657
    %v1746 = vpack.c.b16 %v1660, %v1659
    %v1747 = vpack.c.b16 %v1662, %v1661
    %v1748 = vpack.c.b16 %v1664, %v1663
    %v1749 = vpack.c.b16 %v1666, %v1665
    %v1750 = vpack.c.b16 %v1668, %v1667
    %v1751 = vpack.c.b16 %v1670, %v1669
    %v1752 = vpack.c.b16 %v1672, %v1671
    %v1753 = vpack.c.b16 %v1674, %v1673
    %v1754 = vpack.c.b16 %v1676, %v1675
    %v1755 = vpack.c.b16 %v1678, %v1677
    %v1756 = vpack.c.b16 %v1680, %v1679
    %v1757 = vpack.c.b16 %v1682, %v1681
    %v1758 = vpack.c.b16 %v1684, %v1683
    %v1759 = vpack.c.b16 %v1686, %v1685
    %v1760 = vpack.c.b16 %v1688, %v1687
    %v1761 = vpack.c.b16 %v1690, %v1689
    %v1762 = vpack.c.b16 %v1692, %v1691
    %v1763 = vpack.c.b16 %v1694, %v1693
    %v1764 = vpack.c.b16 %v1696, %v1695
    %v1765 = vpack.c.b16 %v1698, %v1697
    %v1766 = vpack.c.b16 %v1700, %v1699
    %v1767 = vpack.c.b16 %v1702, %v1701
    %v1768 = vpack.c.b16 %v1704, %v1703
    %1833 = vmatpush.bf16.msra.mxu0 %v1712
    %1834 = vmatpush.bf16.msra.mxu0 %v1711
    %1835 = vmatpush.bf16.msra.mxu0 %v1710
    %1836 = vmatpush.bf16.msra.mxu0 %v1709
    %1837 = vmatpush.bf16.msra.mxu0 %v1708
    %1838 = vmatpush.bf16.msra.mxu0 %v1707
    %1839 = vmatpush.bf16.msra.mxu0 %v1706
    %1840 = vmatpush.bf16.msra.mxu0 %v1705
    %1841 = vmatmul.bf16.gmra.mxu0 %v1309
    %v1842 = vpop.f32.mrf.mxu0
    %v1843 = vadd.f32 %v1447, %v1842
    %v1844 = vpop.f32.mrf.mxu0
    %v1845 = vadd.f32 %v1447, %v1844
    %1846 = vdwg.mxu0
    %1847 = vmatpush.bf16.msra.mxu0 %v1720
    %1848 = vmatpush.bf16.msra.mxu0 %v1719
    %1849 = vmatpush.bf16.msra.mxu0 %v1718
    %1850 = vmatpush.bf16.msra.mxu0 %v1717
    %1851 = vmatpush.bf16.msra.mxu0 %v1716
    %1852 = vmatpush.bf16.msra.mxu0 %v1715
    %1853 = vmatpush.bf16.msra.mxu0 %v1714
    %1854 = vmatpush.bf16.msra.mxu0 %v1713
    %1855 = vmatmul.bf16.gmra.mxu0 %v1310
    %v1856 = vpop.f32.mrf.mxu0
    %v1857 = vadd.f32 %v1843, %v1856
    %v1858 = vpop.f32.mrf.mxu0
    %v1859 = vadd.f32 %v1845, %v1858
    %1860 = vdwg.mxu0
    %1861 = vmatpush.bf16.msra.mxu0 %v1728
    %1862 = vmatpush.bf16.msra.mxu0 %v1727
    %1863 = vmatpush.bf16.msra.mxu0 %v1726
    %1864 = vmatpush.bf16.msra.mxu0 %v1725
    %1865 = vmatpush.bf16.msra.mxu0 %v1724
    %1866 = vmatpush.bf16.msra.mxu0 %v1723
    %1867 = vmatpush.bf16.msra.mxu0 %v1722
    %1868 = vmatpush.bf16.msra.mxu0 %v1721
    %1869 = vmatmul.bf16.gmra.mxu0 %v1311
    %v1870 = vpop.f32.mrf.mxu0
    %v1871 = vadd.f32 %v1857, %v1870
    %v1872 = vpop.f32.mrf.mxu0
    %v1873 = vadd.f32 %v1859, %v1872
    %1874 = vdwg.mxu0
    %1875 = vmatpush.bf16.msra.mxu0 %v1736
    %1876 = vmatpush.bf16.msra.mxu0 %v1735
    %1877 = vmatpush.bf16.msra.mxu0 %v1734
    %1878 = vmatpush.bf16.msra.mxu0 %v1733
    %1879 = vmatpush.bf16.msra.mxu0 %v1732
    %1880 = vmatpush.bf16.msra.mxu0 %v1731
    %1881 = vmatpush.bf16.msra.mxu0 %v1730
    %1882 = vmatpush.bf16.msra.mxu0 %v1729
    %1883 = vmatmul.bf16.gmra.mxu0 %v1312
    %v1884 = vpop.f32.mrf.mxu0
    %v1885 = vadd.f32 %v1871, %v1884
    %v1886 = vpop.f32.mrf.mxu0
    %v1887 = vadd.f32 %v1873, %v1886
    %1888 = vdwg.mxu0
    %1889 = vmatpush.bf16.msra.mxu0 %v1744
    %1890 = vmatpush.bf16.msra.mxu0 %v1743
    %1891 = vmatpush.bf16.msra.mxu0 %v1742
    %1892 = vmatpush.bf16.msra.mxu0 %v1741
    %1893 = vmatpush.bf16.msra.mxu0 %v1740
    %1894 = vmatpush.bf16.msra.mxu0 %v1739
    %1895 = vmatpush.bf16.msra.mxu0 %v1738
    %1896 = vmatpush.bf16.msra.mxu0 %v1737
    %1897 = vmatmul.bf16.gmra.mxu0 %v1313
    %v1898 = vpop.f32.mrf.mxu0
    %v1899 = vadd.f32 %v1885, %v1898
    %v1900 = vpop.f32.mrf.mxu0
    %v1901 = vadd.f32 %v1887, %v1900
    %1902 = vdwg.mxu0
    %1903 = vmatpush.bf16.msra.mxu0 %v1752
    %1904 = vmatpush.bf16.msra.mxu0 %v1751
    %1905 = vmatpush.bf16.msra.mxu0 %v1750
    %1906 = vmatpush.bf16.msra.mxu0 %v1749
    %1907 = vmatpush.bf16.msra.mxu0 %v1748
    %1908 = vmatpush.bf16.msra.mxu0 %v1747
    %1909 = vmatpush.bf16.msra.mxu0 %v1746
    %1910 = vmatpush.bf16.msra.mxu0 %v1745
    %1911 = vmatmul.bf16.gmra.mxu0 %v1314
    %v1912 = vpop.f32.mrf.mxu0
    %v1913 = vadd.f32 %v1899, %v1912
    %v1914 = vpop.f32.mrf.mxu0
    %v1915 = vadd.f32 %v1901, %v1914
    %1916 = vdwg.mxu0
    %1917 = vmatpush.bf16.msra.mxu0 %v1760
    %1918 = vmatpush.bf16.msra.mxu0 %v1759
    %1919 = vmatpush.bf16.msra.mxu0 %v1758
    %1920 = vmatpush.bf16.msra.mxu0 %v1757
    %1921 = vmatpush.bf16.msra.mxu0 %v1756
    %1922 = vmatpush.bf16.msra.mxu0 %v1755
    %1923 = vmatpush.bf16.msra.mxu0 %v1754
    %1924 = vmatpush.bf16.msra.mxu0 %v1753
    %1925 = vmatmul.bf16.gmra.mxu0 %v1315
    %v1926 = vpop.f32.mrf.mxu0
    %v1927 = vadd.f32 %v1913, %v1926
    %v1928 = vpop.f32.mrf.mxu0
    %v1929 = vadd.f32 %v1915, %v1928
    %1930 = vdwg.mxu0
    %1931 = vmatpush.bf16.msra.mxu0 %v1768
    %1932 = vmatpush.bf16.msra.mxu0 %v1767
    %1933 = vmatpush.bf16.msra.mxu0 %v1766
    %1934 = vmatpush.bf16.msra.mxu0 %v1765
    %1935 = vmatpush.bf16.msra.mxu0 %v1764
    %1936 = vmatpush.bf16.msra.mxu0 %v1763
    %1937 = vmatpush.bf16.msra.mxu0 %v1762
    %1938 = vmatpush.bf16.msra.mxu0 %v1761
    %1939 = vmatmul.bf16.gmra.mxu0 %v1316
    %v1940 = vpop.f32.mrf.mxu0
    %v1941 = vadd.f32 %v1927, %v1940
    %v1942 = vpop.f32.mrf.mxu0
    %v1943 = vadd.f32 %v1929, %v1942
    %1944 = vdwg.mxu0
    %v1945 = vadd.f32 %v1941, %v88
    %v1946 = vadd.f32 %v1943, %v89
    %1947 = vadd.xlane.f32.xlu0 %v1945
    %v1948 = vpop.xlane.xlu0 %1947
    %1949 = vadd.xlane.f32.xlu0 %v1946
    %v1950 = vpop.xlane.xlu0 %1949
    %v1951 = vrcp.pop 128.0
    %v1952 = vmul.f32 128.0, %v1951
    %v1953 = vsub.f32 1.0, %v1952
    %v1954 = vmul.f32 %v1951, %v1953
    %v1955 = vadd.f32 %v1951, %v1954
    %vm1956 = vweird.f32 %v1951
    %v1957 = vsel %vm1956, %v1951, %v1955
    %v1958 = vmul.f32 %v1948, %v1957
    %v1959 = vmul.f32 %v1950, %v1957
    %v1960 = vsub.f32 %v1945, %v1958
    %v1961 = vsub.f32 %v1946, %v1959
    %v1962 = vmul.f32 %v1960, %v1960
    %v1963 = vmul.f32 %v1961, %v1961
    %1964 = vadd.xlane.f32.xlu0 %v1962
    %v1965 = vpop.xlane.xlu0 %1964
    %1966 = vadd.xlane.f32.xlu0 %v1963
    %v1967 = vpop.xlane.xlu0 %1966
    %v1968 = vmul.f32 %v1965, %v1957
    %v1969 = vmul.f32 %v1967, %v1957
    %v1970 = vadd.f32 %v1968, 1e-12
    %v1971 = vadd.f32 %v1969, 1e-12
    %v1972 = vrsqrt.pop %v1970
    %v1973 = vmul.f32 %v1972, %v1970
    %v1974 = vmul.f32 %v1973, %v1972
    %v1975 = vmul.f32 0.5, %v1974
    %v1976 = vsub.f32 1.5, %v1975
    %v1977 = vmul.f32 %v1972, %v1976
    %vm1978 = vweird.f32 %v1970
    %vm1979 = vweird.f32 %v1972
    %vm1980 = vmor %vm1978, %vm1979
    %v1981 = vsel %vm1980, %v1972, %v1977
    %v1982 = vrsqrt.pop %v1971
    %v1983 = vmul.f32 %v1982, %v1971
    %v1984 = vmul.f32 %v1983, %v1982
    %v1985 = vmul.f32 0.5, %v1984
    %v1986 = vsub.f32 1.5, %v1985
    %v1987 = vmul.f32 %v1982, %v1986
    %vm1988 = vweird.f32 %v1971
    %vm1989 = vweird.f32 %v1982
    %vm1990 = vmor %vm1988, %vm1989
    %v1991 = vsel %vm1990, %v1982, %v1987
    %v1992 = vmul.f32 %v1960, %v1981
    %v1993 = vmul.f32 %v1961, %v1991
    %v1994 = vld [vmem:[%s5] sm:$0x1]
    %v1996 = vperm.slane %v1994, 0
    %v1998 = vmul.f32 %v1992, %v1996
    %v1999 = vmul.f32 %v1993, %v1996
    %v2000 = vld [vmem:[%s6] sm:$0x1]
    %v2002 = vperm.slane %v2000, 0
    %v2004 = vadd.f32 %v1998, %v2002
    %v2005 = vadd.f32 %v1999, %v2002
    %2006 = vst [vmem:[#allocation10] sm:$0xff] %v2004
    %2007 = vst [vmem:[#allocation10 + $0x8] sm:$0xff] %v2005
    // Predicated region
    $region46: #{tpu_custom_call.1} parent=1 // pred_check
      _
    $region47: #{tpu_custom_call.1} parent=1 // pred_check_branch
      %2009 = sbr.rel (0) target = $region49
    $region48: #{tpu_custom_call.1} parent=1 // pred_region
      %2011 = vsyncadd [#allocation4], 0
      %s2012 = sshll.u32 [#allocation10], 4
      %s2013 = int_to_ptr.vmem [resolvable:$true] %s2012
      %s2014 = sshll.u32 %s7, 4
      %s2015 = int_to_ptr.hbm [resolvable:$true] %s2014
      %2020 = dma.vmem_to_hbm [thread:$0]  %s2013, 256, %s2015, [#allocation4], 128, 128, 8
    $region49: #{tpu_custom_call.1} parent=1 // pred_fallthru
      _
    // Predicated region
    $region50: #{tpu_custom_call.1} parent=1 // pred_check
      _
    $region51: #{tpu_custom_call.1} parent=1 // pred_check_branch
      %2022 = sbr.rel (0) target = $region53
    $region52: #{tpu_custom_call.1} parent=1 // pred_region
      %2024 = dma.done [#allocation4], 256
    $region53: #{tpu_custom_call.1} parent=1 // pred_fallthru
      _
    %2025 = vsyncpa [#allocation3], 1
    %2026 = vsyncpa [#allocation6], 1
    %2027 = vsyncpa [#allocation9], 1
    %2028 = vsyncpa [#allocation4], 1

</llo_original>
